<compile_context>
chip_gen: v7x
topology: tpu7x:2x2x1
jax: 0.10.0
libtpu: 0.0.40
codegen_flags: <defaults>
</compile_context>

<pallas_src>
import jax
import jax.numpy as jnp
from jax import lax
from jax.experimental import pallas as pl
from jax.experimental.pallas import tpu as pltpu

RATIO = 1.0


def _ceil_to(n, k):
    return ((n + k - 1) // k) * k


def _cnnrnn_res_kernel(x_ref, a_ref, wf_ref, bgi_ref, whhT_ref, bhn_ref,
                       w1T_ref, b1_ref, wres_ref, bres_ref,
                       out_ref, gi_scr):
    T, Bp, mp = x_ref.shape
    Hp = whhT_ref.shape[0]
    RW = wres_ref.shape[0]

    # ---- hoisted pre-pass: one big MXU matmul over all timesteps -----------
    # gi_all = x @ ((adj*mask) @ W_ih^T) + (b_ih [+ b_hh for r,z gates])
    x2d = x_ref[...].reshape(T * Bp, mp)
    gi_all = jnp.dot(x2d, wf_ref[...], preferred_element_type=jnp.float32)
    gi_all = gi_all + bgi_ref[...]
    gi_scr[...] = gi_all.reshape(T, Bp, 3 * Hp)

    # ---- recurrence: only h @ W_hh^T + gate math per step ------------------
    bhn = jnp.broadcast_to(bhn_ref[...], (Bp, Hp))      # hoisted broadcast

    def step(t, h):
        gi = gi_scr[t]                                   # (Bp, 3Hp), lane-aligned gates
        gh = jnp.dot(h, whhT_ref[...], preferred_element_type=jnp.float32)
        r = jax.nn.sigmoid(gi[:, 0:Hp] + gh[:, 0:Hp])
        z = jax.nn.sigmoid(gi[:, Hp:2 * Hp] + gh[:, Hp:2 * Hp])
        n = jnp.tanh(gi[:, 2 * Hp:3 * Hp] + r * (gh[:, 2 * Hp:3 * Hp] + bhn))
        return (1.0 - z) * n + z * h

    h0 = jnp.zeros((Bp, Hp), jnp.float32)
    h = lax.fori_loop(0, T, step, h0, unroll=(T <= 16))

    # ---- residual window: true xm = x_t @ A, only last RW timesteps --------
    x_win = x_ref[pl.ds(T - RW, RW)]                     # (RW, Bp, mp)
    xm = jnp.dot(x_win.reshape(RW * Bp, mp), a_ref[...],
                 preferred_element_type=jnp.float32).reshape(RW, Bp, mp)
    zacc = jnp.zeros((Bp, mp), jnp.float32)
    for k in range(RW):                                  # RW <= 4, static
        zacc = zacc + wres_ref[k] * xm[k]

    # ---- head + residual combine (lane-dense, unmasked store) --------------
    res = jnp.dot(h, w1T_ref[...], preferred_element_type=jnp.float32) + b1_ref[...]
    out_ref[...] = res * RATIO + zacc + bres_ref[0]


def cnnrnn_res_forward(x, params, horizon):
    """x: (B, T, m) float32 (PyTorch batch-first). Returns ((B, horizon, m), None)."""
    B, T, m = x.shape
    H = params["w_hh"].shape[1]
    RW = params["w_res"].shape[0]
    f32 = jnp.float32

    Bp = _ceil_to(B, 8)        # full sublanes
    mp = _ceil_to(m, 128)      # lane-dense features / output
    Hp = _ceil_to(H, 128)      # lane-aligned gate slices

    # time-major, zero-padded input
    xt = jnp.transpose(x, (1, 0, 2)).astype(f32)
    xt = jnp.pad(xt, ((0, 0), (0, Bp - B), (0, mp - m)))

    # pre-masked adjacency (mask_mat folded in the wrapper)
    A = (params["adj"] * params["mask"]).astype(f32)
    A = jnp.pad(A, ((0, mp - m), (0, mp - m)))

    # per-gate zero-padded GRU weights, laid out lane-aligned: [r | z | n]
    w_ih = jnp.pad(params["w_ih"].astype(f32).reshape(3, H, m),
                   ((0, 0), (0, Hp - H), (0, mp - m)))
    wihT = jnp.transpose(w_ih, (2, 0, 1)).reshape(mp, 3 * Hp)
    wf = A @ wihT                                        # fused (adj*mask) @ W_ih^T

    w_hh = jnp.pad(params["w_hh"].astype(f32).reshape(3, H, H),
                   ((0, 0), (0, Hp - H), (0, Hp - H)))
    whhT = jnp.transpose(w_hh, (2, 0, 1)).reshape(Hp, 3 * Hp)

    b_ih = jnp.pad(params["b_ih"].astype(f32).reshape(3, H), ((0, 0), (0, Hp - H)))
    b_hh = jnp.pad(params["b_hh"].astype(f32).reshape(3, H), ((0, 0), (0, Hp - H)))
    # r,z: both biases fold into the pre-pass; n: only b_ih (b_hh_n sits inside tanh arg)
    bias_gi = jnp.concatenate([b_ih[0] + b_hh[0], b_ih[1] + b_hh[1], b_ih[2]])[None, :]
    b_hh_n = b_hh[2][None, :]

    w1T = jnp.pad(params["w1"].astype(f32).T, ((0, Hp - H), (0, mp - m)))
    b1 = jnp.pad(params["b1"].astype(f32), (0, mp - m))[None, :]

    wres = params["w_res"].astype(f32)                   # (RW,)  -> SMEM
    bres = params["b_res"].astype(f32)                   # (1,)   -> SMEM

    vmem = pl.BlockSpec(memory_space=pltpu.MemorySpace.VMEM)
    smem = pl.BlockSpec(memory_space=pltpu.MemorySpace.SMEM)

    out2d = pl.pallas_call(
        _cnnrnn_res_kernel,
        out_shape=jax.ShapeDtypeStruct((Bp, mp), f32),
        in_specs=[vmem,   # x       (T, Bp, mp)
                  vmem,   # A       (mp, mp)
                  vmem,   # W_fused (mp, 3Hp)
                  vmem,   # bias_gi (1, 3Hp)
                  vmem,   # W_hh^T  (Hp, 3Hp)
                  vmem,   # b_hh_n  (1, Hp)
                  vmem,   # W1^T    (Hp, mp)
                  vmem,   # b1      (1, mp)
                  smem,   # w_res   (RW,)
                  smem],  # b_res   (1,)
        out_specs=vmem,
        scratch_shapes=[pltpu.VMEM((T, Bp, 3 * Hp), f32)],   # hoisted gi_all
    )(xt, A, wf, bias_gi, whhT, b_hh_n, w1T, b1, wres, bres)

    res = out2d[:B, :m]
    # res.unsqueeze(1).expand(-1, h, -1)
    return jnp.broadcast_to(res[:, None, :], (B, horizon, m)), None


def reference_forward(x, p, horizon):
    """Pure-JAX reference mirroring the PyTorch forward (GRU, eval-mode dropout)."""
    B, T, m = x.shape
    H = p["w_hh"].shape[1]
    RW = p["w_res"].shape[0]
    A = p["adj"] * p["mask"]
    xm = x @ A
    h = jnp.zeros((B, H), jnp.float32)
    for t in range(T):
        gi = xm[:, t] @ p["w_ih"].T + p["b_ih"]
        gh = h @ p["w_hh"].T + p["b_hh"]
        i_r, i_z, i_n = jnp.split(gi, 3, axis=1)
        h_r, h_z, h_n = jnp.split(gh, 3, axis=1)
        r = jax.nn.sigmoid(i_r + h_r)
        z = jax.nn.sigmoid(i_z + h_z)
        n = jnp.tanh(i_n + r * h_n)
        h = (1.0 - z) * n + z * h
    res = h @ p["w1"].T + p["b1"]
    zwin = xm[:, T - RW:, :]
    zflat = jnp.transpose(zwin, (0, 2, 1)).reshape(-1, RW)
    zout = (zflat @ p["w_res"][:, None] + p["b_res"]).reshape(B, m)
    res = res * RATIO + zout
    return jnp.broadcast_to(res[:, None, :], (B, horizon, m)), None


def make_params(key, m, H, RW):
    ks = jax.random.split(key, 10)
    scale = 0.1
    return {
        "adj":   jax.random.normal(ks[0], (m, m), jnp.float32),
        "mask":  jax.random.normal(ks[1], (m, m), jnp.float32) * scale,
        "w_ih":  jax.random.normal(ks[2], (3 * H, m), jnp.float32) * scale,
        "w_hh":  jax.random.normal(ks[3], (3 * H, H), jnp.float32) * scale,
        "b_ih":  jax.random.normal(ks[4], (3 * H,), jnp.float32) * scale,
        "b_hh":  jax.random.normal(ks[5], (3 * H,), jnp.float32) * scale,
        "w1":    jax.random.normal(ks[6], (m, H), jnp.float32) * scale,
        "b1":    jax.random.normal(ks[7], (m,), jnp.float32) * scale,
        "w_res": jax.random.normal(ks[8], (RW,), jnp.float32) * scale,
        "b_res": jax.random.normal(ks[9], (1,), jnp.float32) * scale,
    }


if __name__ == "__main__":
    B, T, m, H, horizon = 2, 8, 16, 32, 4
    RW = min(4, T)   # residual_window = min(4, window)

    key = jax.random.PRNGKey(0)
    kx, kp = jax.random.split(key)
    x = jax.random.normal(kx, (B, T, m), jnp.float32)
    params = make_params(kp, m, H, RW)

    out, _ = cnnrnn_res_forward(x, params, horizon)
    out = jax.block_until_ready(out)

    ref, _ = reference_forward(x, params, horizon)
    assert out.shape == (B, horizon, m)
    assert jnp.allclose(out, ref, atol=1e-4, rtol=1e-4), (
        f"max abs diff {jnp.max(jnp.abs(out - ref))}")

    print("KERNEL_OK")
</pallas_src>

<mosaic_0001>
module attributes {stable_mosaic.version = 11 : i64} {
  func.func @_cnnrnn_res_kernel(%arg0: memref<8x8x128xf32, #tpu.memory_space<vmem>>, %arg1: memref<128x128xf32, #tpu.memory_space<vmem>>, %arg2: memref<128x384xf32, #tpu.memory_space<vmem>>, %arg3: memref<1x384xf32, #tpu.memory_space<vmem>>, %arg4: memref<128x384xf32, #tpu.memory_space<vmem>>, %arg5: memref<1x128xf32, #tpu.memory_space<vmem>>, %arg6: memref<128x128xf32, #tpu.memory_space<vmem>>, %arg7: memref<1x128xf32, #tpu.memory_space<vmem>>, %arg8: memref<4xf32, #tpu.memory_space<smem>>, %arg9: memref<1xf32, #tpu.memory_space<smem>>, %arg10: memref<8x128xf32, #tpu.memory_space<vmem>>, %arg11: memref<8x8x384xf32, #tpu.memory_space<vmem>>) attributes {dimension_semantics = [], scalar_prefetch = 0 : i64, scratch_operands = 1 : i64, tpu.core_type = #tpu.core_type<tc>} {
    %c0 = arith.constant 0 : index
    %c0_0 = arith.constant 0 : index
    %c0_1 = arith.constant 0 : index
    %0 = vector.load %arg0[%c0, %c0_0, %c0_1] : memref<8x8x128xf32, #tpu.memory_space<vmem>>, vector<8x8x128xf32>
    %1 = vector.shape_cast %0 : vector<8x8x128xf32> to vector<64x128xf32>
    %c0_2 = arith.constant 0 : index
    %c0_3 = arith.constant 0 : index
    %2 = vector.load %arg2[%c0_2, %c0_3] : memref<128x384xf32, #tpu.memory_space<vmem>>, vector<128x384xf32>
    %cst = arith.constant dense<0.000000e+00> : vector<64x384xf32>
    %3 = tpu.matmul %1, %2, %cst {dimension_numbers = #tpu.dot_dimension_numbers<[1], [0], [0], [1], [0, 0, 1, 1], [], []>} : vector<64x128xf32>, vector<128x384xf32>, vector<64x384xf32> -> vector<64x384xf32>
    %c0_4 = arith.constant 0 : index
    %c0_5 = arith.constant 0 : index
    %4 = vector.load %arg3[%c0_4, %c0_5] : memref<1x384xf32, #tpu.memory_space<vmem>>, vector<1x384xf32>
    %5 = vector.broadcast %4 : vector<1x384xf32> to vector<64x384xf32>
    %6 = arith.addf %3, %5 : vector<64x384xf32>
    %7 = vector.shape_cast %6 : vector<64x384xf32> to vector<8x8x384xf32>
    %c0_6 = arith.constant 0 : index
    %c0_7 = arith.constant 0 : index
    %c0_8 = arith.constant 0 : index
    %8 = vector.load %arg11[%c0_6, %c0_7, %c0_8] : memref<8x8x384xf32, #tpu.memory_space<vmem>>, vector<8x8x384xf32>
    tpu.vector_store %arg11[%c0_6, %c0_7, %c0_8], %7 {strides = array<i32>} : memref<8x8x384xf32, #tpu.memory_space<vmem>>, vector<8x8x384xf32>,
    %c0_9 = arith.constant 0 : index
    %c0_10 = arith.constant 0 : index
    %9 = vector.load %arg5[%c0_9, %c0_10] : memref<1x128xf32, #tpu.memory_space<vmem>>, vector<1x128xf32>
    %10 = vector.shape_cast %9 : vector<1x128xf32> to vector<1x128xf32>
    %11 = vector.broadcast %10 : vector<1x128xf32> to vector<8x128xf32>
    %cst_11 = arith.constant 0.000000e+00 : f32
    %12 = vector.broadcast %cst_11 : f32 to vector<8x128xf32>
    %c0_i32 = arith.constant 0 : i32
    %13 = arith.index_cast %c0_i32 : i32 to index
    %c0_12 = arith.constant 0 : index
    %c0_13 = arith.constant 0 : index
    %14 = vector.load %arg11[%13, %c0_12, %c0_13] : memref<8x8x384xf32, #tpu.memory_space<vmem>>, vector<1x8x384xf32>
    %15 = vector.shape_cast %14 : vector<1x8x384xf32> to vector<8x384xf32>
    %c0_14 = arith.constant 0 : index
    %c0_15 = arith.constant 0 : index
    %16 = vector.load %arg4[%c0_14, %c0_15] : memref<128x384xf32, #tpu.memory_space<vmem>>, vector<128x384xf32>
    %cst_16 = arith.constant dense<0.000000e+00> : vector<8x384xf32>
    %17 = tpu.matmul %12, %16, %cst_16 {dimension_numbers = #tpu.dot_dimension_numbers<[1], [0], [0], [1], [0, 0, 1, 1], [], []>} : vector<8x128xf32>, vector<128x384xf32>, vector<8x384xf32> -> vector<8x384xf32>
    %18 = vector.extract_strided_slice %15 {offsets = [0, 0], sizes = [8, 128], strides = [1, 1]} : vector<8x384xf32> to vector<8x128xf32>
    %19 = vector.extract_strided_slice %17 {offsets = [0, 0], sizes = [8, 128], strides = [1, 1]} : vector<8x384xf32> to vector<8x128xf32>
    %20 = arith.addf %18, %19 : vector<8x128xf32>
    %21 = arith.negf %20 : vector<8x128xf32>
    %22 = math.exp %21 : vector<8x128xf32>
    %cst_17 = arith.constant 1.000000e+00 : f32
    %23 = vector.broadcast %cst_17 : f32 to vector<8x128xf32>
    %24 = arith.addf %23, %22 : vector<8x128xf32>
    %25 = arith.divf %23, %24 : vector<8x128xf32>
    %26 = vector.extract_strided_slice %15 {offsets = [0, 128], sizes = [8, 128], strides = [1, 1]} : vector<8x384xf32> to vector<8x128xf32>
    %27 = vector.extract_strided_slice %17 {offsets = [0, 128], sizes = [8, 128], strides = [1, 1]} : vector<8x384xf32> to vector<8x128xf32>
    %28 = arith.addf %26, %27 : vector<8x128xf32>
    %29 = arith.negf %28 : vector<8x128xf32>
    %30 = math.exp %29 : vector<8x128xf32>
    %cst_18 = arith.constant 1.000000e+00 : f32
    %31 = vector.broadcast %cst_18 : f32 to vector<8x128xf32>
    %32 = arith.addf %31, %30 : vector<8x128xf32>
    %33 = arith.divf %31, %32 : vector<8x128xf32>
    %34 = vector.extract_strided_slice %15 {offsets = [0, 256], sizes = [8, 128], strides = [1, 1]} : vector<8x384xf32> to vector<8x128xf32>
    %35 = vector.extract_strided_slice %17 {offsets = [0, 256], sizes = [8, 128], strides = [1, 1]} : vector<8x384xf32> to vector<8x128xf32>
    %36 = arith.addf %35, %11 : vector<8x128xf32>
    %37 = arith.mulf %25, %36 : vector<8x128xf32>
    %38 = arith.addf %34, %37 : vector<8x128xf32>
    %39 = math.tanh %38 : vector<8x128xf32>
    %cst_19 = arith.constant 1.000000e+00 : f32
    %40 = vector.broadcast %cst_19 : f32 to vector<8x128xf32>
    %41 = arith.subf %40, %33 : vector<8x128xf32>
    %42 = arith.mulf %41, %39 : vector<8x128xf32>
    %43 = arith.mulf %33, %12 : vector<8x128xf32>
    %44 = arith.addf %42, %43 : vector<8x128xf32>
    %c1_i32 = arith.constant 1 : i32
    %45 = arith.index_cast %c1_i32 : i32 to index
    %c0_20 = arith.constant 0 : index
    %c0_21 = arith.constant 0 : index
    %46 = vector.load %arg11[%45, %c0_20, %c0_21] : memref<8x8x384xf32, #tpu.memory_space<vmem>>, vector<1x8x384xf32>
    %47 = vector.shape_cast %46 : vector<1x8x384xf32> to vector<8x384xf32>
    %c0_22 = arith.constant 0 : index
    %c0_23 = arith.constant 0 : index
    %48 = vector.load %arg4[%c0_22, %c0_23] : memref<128x384xf32, #tpu.memory_space<vmem>>, vector<128x384xf32>
    %cst_24 = arith.constant dense<0.000000e+00> : vector<8x384xf32>
    %49 = tpu.matmul %44, %48, %cst_24 {dimension_numbers = #tpu.dot_dimension_numbers<[1], [0], [0], [1], [0, 0, 1, 1], [], []>} : vector<8x128xf32>, vector<128x384xf32>, vector<8x384xf32> -> vector<8x384xf32>
    %50 = vector.extract_strided_slice %47 {offsets = [0, 0], sizes = [8, 128], strides = [1, 1]} : vector<8x384xf32> to vector<8x128xf32>
    %51 = vector.extract_strided_slice %49 {offsets = [0, 0], sizes = [8, 128], strides = [1, 1]} : vector<8x384xf32> to vector<8x128xf32>
    %52 = arith.addf %50, %51 : vector<8x128xf32>
    %53 = arith.negf %52 : vector<8x128xf32>
    %54 = math.exp %53 : vector<8x128xf32>
    %cst_25 = arith.constant 1.000000e+00 : f32
    %55 = vector.broadcast %cst_25 : f32 to vector<8x128xf32>
    %56 = arith.addf %55, %54 : vector<8x128xf32>
    %57 = arith.divf %55, %56 : vector<8x128xf32>
    %58 = vector.extract_strided_slice %47 {offsets = [0, 128], sizes = [8, 128], strides = [1, 1]} : vector<8x384xf32> to vector<8x128xf32>
    %59 = vector.extract_strided_slice %49 {offsets = [0, 128], sizes = [8, 128], strides = [1, 1]} : vector<8x384xf32> to vector<8x128xf32>
    %60 = arith.addf %58, %59 : vector<8x128xf32>
    %61 = arith.negf %60 : vector<8x128xf32>
    %62 = math.exp %61 : vector<8x128xf32>
    %cst_26 = arith.constant 1.000000e+00 : f32
    %63 = vector.broadcast %cst_26 : f32 to vector<8x128xf32>
    %64 = arith.addf %63, %62 : vector<8x128xf32>
    %65 = arith.divf %63, %64 : vector<8x128xf32>
    %66 = vector.extract_strided_slice %47 {offsets = [0, 256], sizes = [8, 128], strides = [1, 1]} : vector<8x384xf32> to vector<8x128xf32>
    %67 = vector.extract_strided_slice %49 {offsets = [0, 256], sizes = [8, 128], strides = [1, 1]} : vector<8x384xf32> to vector<8x128xf32>
    %68 = arith.addf %67, %11 : vector<8x128xf32>
    %69 = arith.mulf %57, %68 : vector<8x128xf32>
    %70 = arith.addf %66, %69 : vector<8x128xf32>
    %71 = math.tanh %70 : vector<8x128xf32>
    %cst_27 = arith.constant 1.000000e+00 : f32
    %72 = vector.broadcast %cst_27 : f32 to vector<8x128xf32>
    %73 = arith.subf %72, %65 : vector<8x128xf32>
    %74 = arith.mulf %73, %71 : vector<8x128xf32>
    %75 = arith.mulf %65, %44 : vector<8x128xf32>
    %76 = arith.addf %74, %75 : vector<8x128xf32>
    %c2_i32 = arith.constant 2 : i32
    %77 = arith.index_cast %c2_i32 : i32 to index
    %c0_28 = arith.constant 0 : index
    %c0_29 = arith.constant 0 : index
    %78 = vector.load %arg11[%77, %c0_28, %c0_29] : memref<8x8x384xf32, #tpu.memory_space<vmem>>, vector<1x8x384xf32>
    %79 = vector.shape_cast %78 : vector<1x8x384xf32> to vector<8x384xf32>
    %c0_30 = arith.constant 0 : index
    %c0_31 = arith.constant 0 : index
    %80 = vector.load %arg4[%c0_30, %c0_31] : memref<128x384xf32, #tpu.memory_space<vmem>>, vector<128x384xf32>
    %cst_32 = arith.constant dense<0.000000e+00> : vector<8x384xf32>
    %81 = tpu.matmul %76, %80, %cst_32 {dimension_numbers = #tpu.dot_dimension_numbers<[1], [0], [0], [1], [0, 0, 1, 1], [], []>} : vector<8x128xf32>, vector<128x384xf32>, vector<8x384xf32> -> vector<8x384xf32>
    %82 = vector.extract_strided_slice %79 {offsets = [0, 0], sizes = [8, 128], strides = [1, 1]} : vector<8x384xf32> to vector<8x128xf32>
    %83 = vector.extract_strided_slice %81 {offsets = [0, 0], sizes = [8, 128], strides = [1, 1]} : vector<8x384xf32> to vector<8x128xf32>
    %84 = arith.addf %82, %83 : vector<8x128xf32>
    %85 = arith.negf %84 : vector<8x128xf32>
    %86 = math.exp %85 : vector<8x128xf32>
    %cst_33 = arith.constant 1.000000e+00 : f32
    %87 = vector.broadcast %cst_33 : f32 to vector<8x128xf32>
    %88 = arith.addf %87, %86 : vector<8x128xf32>
    %89 = arith.divf %87, %88 : vector<8x128xf32>
    %90 = vector.extract_strided_slice %79 {offsets = [0, 128], sizes = [8, 128], strides = [1, 1]} : vector<8x384xf32> to vector<8x128xf32>
    %91 = vector.extract_strided_slice %81 {offsets = [0, 128], sizes = [8, 128], strides = [1, 1]} : vector<8x384xf32> to vector<8x128xf32>
    %92 = arith.addf %90, %91 : vector<8x128xf32>
    %93 = arith.negf %92 : vector<8x128xf32>
    %94 = math.exp %93 : vector<8x128xf32>
    %cst_34 = arith.constant 1.000000e+00 : f32
    %95 = vector.broadcast %cst_34 : f32 to vector<8x128xf32>
    %96 = arith.addf %95, %94 : vector<8x128xf32>
    %97 = arith.divf %95, %96 : vector<8x128xf32>
    %98 = vector.extract_strided_slice %79 {offsets = [0, 256], sizes = [8, 128], strides = [1, 1]} : vector<8x384xf32> to vector<8x128xf32>
    %99 = vector.extract_strided_slice %81 {offsets = [0, 256], sizes = [8, 128], strides = [1, 1]} : vector<8x384xf32> to vector<8x128xf32>
    %100 = arith.addf %99, %11 : vector<8x128xf32>
    %101 = arith.mulf %89, %100 : vector<8x128xf32>
    %102 = arith.addf %98, %101 : vector<8x128xf32>
    %103 = math.tanh %102 : vector<8x128xf32>
    %cst_35 = arith.constant 1.000000e+00 : f32
    %104 = vector.broadcast %cst_35 : f32 to vector<8x128xf32>
    %105 = arith.subf %104, %97 : vector<8x128xf32>
    %106 = arith.mulf %105, %103 : vector<8x128xf32>
    %107 = arith.mulf %97, %76 : vector<8x128xf32>
    %108 = arith.addf %106, %107 : vector<8x128xf32>
    %c3_i32 = arith.constant 3 : i32
    %109 = arith.index_cast %c3_i32 : i32 to index
    %c0_36 = arith.constant 0 : index
    %c0_37 = arith.constant 0 : index
    %110 = vector.load %arg11[%109, %c0_36, %c0_37] : memref<8x8x384xf32, #tpu.memory_space<vmem>>, vector<1x8x384xf32>
    %111 = vector.shape_cast %110 : vector<1x8x384xf32> to vector<8x384xf32>
    %c0_38 = arith.constant 0 : index
    %c0_39 = arith.constant 0 : index
    %112 = vector.load %arg4[%c0_38, %c0_39] : memref<128x384xf32, #tpu.memory_space<vmem>>, vector<128x384xf32>
    %cst_40 = arith.constant dense<0.000000e+00> : vector<8x384xf32>
    %113 = tpu.matmul %108, %112, %cst_40 {dimension_numbers = #tpu.dot_dimension_numbers<[1], [0], [0], [1], [0, 0, 1, 1], [], []>} : vector<8x128xf32>, vector<128x384xf32>, vector<8x384xf32> -> vector<8x384xf32>
    %114 = vector.extract_strided_slice %111 {offsets = [0, 0], sizes = [8, 128], strides = [1, 1]} : vector<8x384xf32> to vector<8x128xf32>
    %115 = vector.extract_strided_slice %113 {offsets = [0, 0], sizes = [8, 128], strides = [1, 1]} : vector<8x384xf32> to vector<8x128xf32>
    %116 = arith.addf %114, %115 : vector<8x128xf32>
    %117 = arith.negf %116 : vector<8x128xf32>
    %118 = math.exp %117 : vector<8x128xf32>
    %cst_41 = arith.constant 1.000000e+00 : f32
    %119 = vector.broadcast %cst_41 : f32 to vector<8x128xf32>
    %120 = arith.addf %119, %118 : vector<8x128xf32>
    %121 = arith.divf %119, %120 : vector<8x128xf32>
    %122 = vector.extract_strided_slice %111 {offsets = [0, 128], sizes = [8, 128], strides = [1, 1]} : vector<8x384xf32> to vector<8x128xf32>
    %123 = vector.extract_strided_slice %113 {offsets = [0, 128], sizes = [8, 128], strides = [1, 1]} : vector<8x384xf32> to vector<8x128xf32>
    %124 = arith.addf %122, %123 : vector<8x128xf32>
    %125 = arith.negf %124 : vector<8x128xf32>
    %126 = math.exp %125 : vector<8x128xf32>
    %cst_42 = arith.constant 1.000000e+00 : f32
    %127 = vector.broadcast %cst_42 : f32 to vector<8x128xf32>
    %128 = arith.addf %127, %126 : vector<8x128xf32>
    %129 = arith.divf %127, %128 : vector<8x128xf32>
    %130 = vector.extract_strided_slice %111 {offsets = [0, 256], sizes = [8, 128], strides = [1, 1]} : vector<8x384xf32> to vector<8x128xf32>
    %131 = vector.extract_strided_slice %113 {offsets = [0, 256], sizes = [8, 128], strides = [1, 1]} : vector<8x384xf32> to vector<8x128xf32>
    %132 = arith.addf %131, %11 : vector<8x128xf32>
    %133 = arith.mulf %121, %132 : vector<8x128xf32>
    %134 = arith.addf %130, %133 : vector<8x128xf32>
    %135 = math.tanh %134 : vector<8x128xf32>
    %cst_43 = arith.constant 1.000000e+00 : f32
    %136 = vector.broadcast %cst_43 : f32 to vector<8x128xf32>
    %137 = arith.subf %136, %129 : vector<8x128xf32>
    %138 = arith.mulf %137, %135 : vector<8x128xf32>
    %139 = arith.mulf %129, %108 : vector<8x128xf32>
    %140 = arith.addf %138, %139 : vector<8x128xf32>
    %c4_i32 = arith.constant 4 : i32
    %141 = arith.index_cast %c4_i32 : i32 to index
    %c0_44 = arith.constant 0 : index
    %c0_45 = arith.constant 0 : index
    %142 = vector.load %arg11[%141, %c0_44, %c0_45] : memref<8x8x384xf32, #tpu.memory_space<vmem>>, vector<1x8x384xf32>
    %143 = vector.shape_cast %142 : vector<1x8x384xf32> to vector<8x384xf32>
    %c0_46 = arith.constant 0 : index
    %c0_47 = arith.constant 0 : index
    %144 = vector.load %arg4[%c0_46, %c0_47] : memref<128x384xf32, #tpu.memory_space<vmem>>, vector<128x384xf32>
    %cst_48 = arith.constant dense<0.000000e+00> : vector<8x384xf32>
    %145 = tpu.matmul %140, %144, %cst_48 {dimension_numbers = #tpu.dot_dimension_numbers<[1], [0], [0], [1], [0, 0, 1, 1], [], []>} : vector<8x128xf32>, vector<128x384xf32>, vector<8x384xf32> -> vector<8x384xf32>
    %146 = vector.extract_strided_slice %143 {offsets = [0, 0], sizes = [8, 128], strides = [1, 1]} : vector<8x384xf32> to vector<8x128xf32>
    %147 = vector.extract_strided_slice %145 {offsets = [0, 0], sizes = [8, 128], strides = [1, 1]} : vector<8x384xf32> to vector<8x128xf32>
    %148 = arith.addf %146, %147 : vector<8x128xf32>
    %149 = arith.negf %148 : vector<8x128xf32>
    %150 = math.exp %149 : vector<8x128xf32>
    %cst_49 = arith.constant 1.000000e+00 : f32
    %151 = vector.broadcast %cst_49 : f32 to vector<8x128xf32>
    %152 = arith.addf %151, %150 : vector<8x128xf32>
    %153 = arith.divf %151, %152 : vector<8x128xf32>
    %154 = vector.extract_strided_slice %143 {offsets = [0, 128], sizes = [8, 128], strides = [1, 1]} : vector<8x384xf32> to vector<8x128xf32>
    %155 = vector.extract_strided_slice %145 {offsets = [0, 128], sizes = [8, 128], strides = [1, 1]} : vector<8x384xf32> to vector<8x128xf32>
    %156 = arith.addf %154, %155 : vector<8x128xf32>
    %157 = arith.negf %156 : vector<8x128xf32>
    %158 = math.exp %157 : vector<8x128xf32>
    %cst_50 = arith.constant 1.000000e+00 : f32
    %159 = vector.broadcast %cst_50 : f32 to vector<8x128xf32>
    %160 = arith.addf %159, %158 : vector<8x128xf32>
    %161 = arith.divf %159, %160 : vector<8x128xf32>
    %162 = vector.extract_strided_slice %143 {offsets = [0, 256], sizes = [8, 128], strides = [1, 1]} : vector<8x384xf32> to vector<8x128xf32>
    %163 = vector.extract_strided_slice %145 {offsets = [0, 256], sizes = [8, 128], strides = [1, 1]} : vector<8x384xf32> to vector<8x128xf32>
    %164 = arith.addf %163, %11 : vector<8x128xf32>
    %165 = arith.mulf %153, %164 : vector<8x128xf32>
    %166 = arith.addf %162, %165 : vector<8x128xf32>
    %167 = math.tanh %166 : vector<8x128xf32>
    %cst_51 = arith.constant 1.000000e+00 : f32
    %168 = vector.broadcast %cst_51 : f32 to vector<8x128xf32>
    %169 = arith.subf %168, %161 : vector<8x128xf32>
    %170 = arith.mulf %169, %167 : vector<8x128xf32>
    %171 = arith.mulf %161, %140 : vector<8x128xf32>
    %172 = arith.addf %170, %171 : vector<8x128xf32>
    %c5_i32 = arith.constant 5 : i32
    %173 = arith.index_cast %c5_i32 : i32 to index
    %c0_52 = arith.constant 0 : index
    %c0_53 = arith.constant 0 : index
    %174 = vector.load %arg11[%173, %c0_52, %c0_53] : memref<8x8x384xf32, #tpu.memory_space<vmem>>, vector<1x8x384xf32>
    %175 = vector.shape_cast %174 : vector<1x8x384xf32> to vector<8x384xf32>
    %c0_54 = arith.constant 0 : index
    %c0_55 = arith.constant 0 : index
    %176 = vector.load %arg4[%c0_54, %c0_55] : memref<128x384xf32, #tpu.memory_space<vmem>>, vector<128x384xf32>
    %cst_56 = arith.constant dense<0.000000e+00> : vector<8x384xf32>
    %177 = tpu.matmul %172, %176, %cst_56 {dimension_numbers = #tpu.dot_dimension_numbers<[1], [0], [0], [1], [0, 0, 1, 1], [], []>} : vector<8x128xf32>, vector<128x384xf32>, vector<8x384xf32> -> vector<8x384xf32>
    %178 = vector.extract_strided_slice %175 {offsets = [0, 0], sizes = [8, 128], strides = [1, 1]} : vector<8x384xf32> to vector<8x128xf32>
    %179 = vector.extract_strided_slice %177 {offsets = [0, 0], sizes = [8, 128], strides = [1, 1]} : vector<8x384xf32> to vector<8x128xf32>
    %180 = arith.addf %178, %179 : vector<8x128xf32>
    %181 = arith.negf %180 : vector<8x128xf32>
    %182 = math.exp %181 : vector<8x128xf32>
    %cst_57 = arith.constant 1.000000e+00 : f32
    %183 = vector.broadcast %cst_57 : f32 to vector<8x128xf32>
    %184 = arith.addf %183, %182 : vector<8x128xf32>
    %185 = arith.divf %183, %184 : vector<8x128xf32>
    %186 = vector.extract_strided_slice %175 {offsets = [0, 128], sizes = [8, 128], strides = [1, 1]} : vector<8x384xf32> to vector<8x128xf32>
    %187 = vector.extract_strided_slice %177 {offsets = [0, 128], sizes = [8, 128], strides = [1, 1]} : vector<8x384xf32> to vector<8x128xf32>
    %188 = arith.addf %186, %187 : vector<8x128xf32>
    %189 = arith.negf %188 : vector<8x128xf32>
    %190 = math.exp %189 : vector<8x128xf32>
    %cst_58 = arith.constant 1.000000e+00 : f32
    %191 = vector.broadcast %cst_58 : f32 to vector<8x128xf32>
    %192 = arith.addf %191, %190 : vector<8x128xf32>
    %193 = arith.divf %191, %192 : vector<8x128xf32>
    %194 = vector.extract_strided_slice %175 {offsets = [0, 256], sizes = [8, 128], strides = [1, 1]} : vector<8x384xf32> to vector<8x128xf32>
    %195 = vector.extract_strided_slice %177 {offsets = [0, 256], sizes = [8, 128], strides = [1, 1]} : vector<8x384xf32> to vector<8x128xf32>
    %196 = arith.addf %195, %11 : vector<8x128xf32>
    %197 = arith.mulf %185, %196 : vector<8x128xf32>
    %198 = arith.addf %194, %197 : vector<8x128xf32>
    %199 = math.tanh %198 : vector<8x128xf32>
    %cst_59 = arith.constant 1.000000e+00 : f32
    %200 = vector.broadcast %cst_59 : f32 to vector<8x128xf32>
    %201 = arith.subf %200, %193 : vector<8x128xf32>
    %202 = arith.mulf %201, %199 : vector<8x128xf32>
    %203 = arith.mulf %193, %172 : vector<8x128xf32>
    %204 = arith.addf %202, %203 : vector<8x128xf32>
    %c6_i32 = arith.constant 6 : i32
    %205 = arith.index_cast %c6_i32 : i32 to index
    %c0_60 = arith.constant 0 : index
    %c0_61 = arith.constant 0 : index
    %206 = vector.load %arg11[%205, %c0_60, %c0_61] : memref<8x8x384xf32, #tpu.memory_space<vmem>>, vector<1x8x384xf32>
    %207 = vector.shape_cast %206 : vector<1x8x384xf32> to vector<8x384xf32>
    %c0_62 = arith.constant 0 : index
    %c0_63 = arith.constant 0 : index
    %208 = vector.load %arg4[%c0_62, %c0_63] : memref<128x384xf32, #tpu.memory_space<vmem>>, vector<128x384xf32>
    %cst_64 = arith.constant dense<0.000000e+00> : vector<8x384xf32>
    %209 = tpu.matmul %204, %208, %cst_64 {dimension_numbers = #tpu.dot_dimension_numbers<[1], [0], [0], [1], [0, 0, 1, 1], [], []>} : vector<8x128xf32>, vector<128x384xf32>, vector<8x384xf32> -> vector<8x384xf32>
    %210 = vector.extract_strided_slice %207 {offsets = [0, 0], sizes = [8, 128], strides = [1, 1]} : vector<8x384xf32> to vector<8x128xf32>
    %211 = vector.extract_strided_slice %209 {offsets = [0, 0], sizes = [8, 128], strides = [1, 1]} : vector<8x384xf32> to vector<8x128xf32>
    %212 = arith.addf %210, %211 : vector<8x128xf32>
    %213 = arith.negf %212 : vector<8x128xf32>
    %214 = math.exp %213 : vector<8x128xf32>
    %cst_65 = arith.constant 1.000000e+00 : f32
    %215 = vector.broadcast %cst_65 : f32 to vector<8x128xf32>
    %216 = arith.addf %215, %214 : vector<8x128xf32>
    %217 = arith.divf %215, %216 : vector<8x128xf32>
    %218 = vector.extract_strided_slice %207 {offsets = [0, 128], sizes = [8, 128], strides = [1, 1]} : vector<8x384xf32> to vector<8x128xf32>
    %219 = vector.extract_strided_slice %209 {offsets = [0, 128], sizes = [8, 128], strides = [1, 1]} : vector<8x384xf32> to vector<8x128xf32>
    %220 = arith.addf %218, %219 : vector<8x128xf32>
    %221 = arith.negf %220 : vector<8x128xf32>
    %222 = math.exp %221 : vector<8x128xf32>
    %cst_66 = arith.constant 1.000000e+00 : f32
    %223 = vector.broadcast %cst_66 : f32 to vector<8x128xf32>
    %224 = arith.addf %223, %222 : vector<8x128xf32>
    %225 = arith.divf %223, %224 : vector<8x128xf32>
    %226 = vector.extract_strided_slice %207 {offsets = [0, 256], sizes = [8, 128], strides = [1, 1]} : vector<8x384xf32> to vector<8x128xf32>
    %227 = vector.extract_strided_slice %209 {offsets = [0, 256], sizes = [8, 128], strides = [1, 1]} : vector<8x384xf32> to vector<8x128xf32>
    %228 = arith.addf %227, %11 : vector<8x128xf32>
    %229 = arith.mulf %217, %228 : vector<8x128xf32>
    %230 = arith.addf %226, %229 : vector<8x128xf32>
    %231 = math.tanh %230 : vector<8x128xf32>
    %cst_67 = arith.constant 1.000000e+00 : f32
    %232 = vector.broadcast %cst_67 : f32 to vector<8x128xf32>
    %233 = arith.subf %232, %225 : vector<8x128xf32>
    %234 = arith.mulf %233, %231 : vector<8x128xf32>
    %235 = arith.mulf %225, %204 : vector<8x128xf32>
    %236 = arith.addf %234, %235 : vector<8x128xf32>
    %c7_i32 = arith.constant 7 : i32
    %237 = arith.index_cast %c7_i32 : i32 to index
    %c0_68 = arith.constant 0 : index
    %c0_69 = arith.constant 0 : index
    %238 = vector.load %arg11[%237, %c0_68, %c0_69] : memref<8x8x384xf32, #tpu.memory_space<vmem>>, vector<1x8x384xf32>
    %239 = vector.shape_cast %238 : vector<1x8x384xf32> to vector<8x384xf32>
    %c0_70 = arith.constant 0 : index
    %c0_71 = arith.constant 0 : index
    %240 = vector.load %arg4[%c0_70, %c0_71] : memref<128x384xf32, #tpu.memory_space<vmem>>, vector<128x384xf32>
    %cst_72 = arith.constant dense<0.000000e+00> : vector<8x384xf32>
    %241 = tpu.matmul %236, %240, %cst_72 {dimension_numbers = #tpu.dot_dimension_numbers<[1], [0], [0], [1], [0, 0, 1, 1], [], []>} : vector<8x128xf32>, vector<128x384xf32>, vector<8x384xf32> -> vector<8x384xf32>
    %242 = vector.extract_strided_slice %239 {offsets = [0, 0], sizes = [8, 128], strides = [1, 1]} : vector<8x384xf32> to vector<8x128xf32>
    %243 = vector.extract_strided_slice %241 {offsets = [0, 0], sizes = [8, 128], strides = [1, 1]} : vector<8x384xf32> to vector<8x128xf32>
    %244 = arith.addf %242, %243 : vector<8x128xf32>
    %245 = arith.negf %244 : vector<8x128xf32>
    %246 = math.exp %245 : vector<8x128xf32>
    %cst_73 = arith.constant 1.000000e+00 : f32
    %247 = vector.broadcast %cst_73 : f32 to vector<8x128xf32>
    %248 = arith.addf %247, %246 : vector<8x128xf32>
    %249 = arith.divf %247, %248 : vector<8x128xf32>
    %250 = vector.extract_strided_slice %239 {offsets = [0, 128], sizes = [8, 128], strides = [1, 1]} : vector<8x384xf32> to vector<8x128xf32>
    %251 = vector.extract_strided_slice %241 {offsets = [0, 128], sizes = [8, 128], strides = [1, 1]} : vector<8x384xf32> to vector<8x128xf32>
    %252 = arith.addf %250, %251 : vector<8x128xf32>
    %253 = arith.negf %252 : vector<8x128xf32>
    %254 = math.exp %253 : vector<8x128xf32>
    %cst_74 = arith.constant 1.000000e+00 : f32
    %255 = vector.broadcast %cst_74 : f32 to vector<8x128xf32>
    %256 = arith.addf %255, %254 : vector<8x128xf32>
    %257 = arith.divf %255, %256 : vector<8x128xf32>
    %258 = vector.extract_strided_slice %239 {offsets = [0, 256], sizes = [8, 128], strides = [1, 1]} : vector<8x384xf32> to vector<8x128xf32>
    %259 = vector.extract_strided_slice %241 {offsets = [0, 256], sizes = [8, 128], strides = [1, 1]} : vector<8x384xf32> to vector<8x128xf32>
    %260 = arith.addf %259, %11 : vector<8x128xf32>
    %261 = arith.mulf %249, %260 : vector<8x128xf32>
    %262 = arith.addf %258, %261 : vector<8x128xf32>
    %263 = math.tanh %262 : vector<8x128xf32>
    %cst_75 = arith.constant 1.000000e+00 : f32
    %264 = vector.broadcast %cst_75 : f32 to vector<8x128xf32>
    %265 = arith.subf %264, %257 : vector<8x128xf32>
    %266 = arith.mulf %265, %263 : vector<8x128xf32>
    %267 = arith.mulf %257, %236 : vector<8x128xf32>
    %268 = arith.addf %266, %267 : vector<8x128xf32>
    %c8_i32 = arith.constant 8 : i32
    %c4 = arith.constant 4 : index
    %c0_76 = arith.constant 0 : index
    %c0_77 = arith.constant 0 : index
    %269 = vector.load %arg0[%c4, %c0_76, %c0_77] : memref<8x8x128xf32, #tpu.memory_space<vmem>>, vector<4x8x128xf32>
    %270 = vector.shape_cast %269 : vector<4x8x128xf32> to vector<32x128xf32>
    %c0_78 = arith.constant 0 : index
    %c0_79 = arith.constant 0 : index
    %271 = vector.load %arg1[%c0_78, %c0_79] : memref<128x128xf32, #tpu.memory_space<vmem>>, vector<128x128xf32>
    %cst_80 = arith.constant dense<0.000000e+00> : vector<32x128xf32>
    %272 = tpu.matmul %270, %271, %cst_80 {dimension_numbers = #tpu.dot_dimension_numbers<[1], [0], [0], [1], [0, 0, 1, 1], [], []>} : vector<32x128xf32>, vector<128x128xf32>, vector<32x128xf32> -> vector<32x128xf32>
    %273 = vector.shape_cast %272 : vector<32x128xf32> to vector<4x8x128xf32>
    %cst_81 = arith.constant 0.000000e+00 : f32
    %274 = vector.broadcast %cst_81 : f32 to vector<8x128xf32>
    %c0_82 = arith.constant 0 : index
    %275 = memref.load %arg8[%c0_82] : memref<4xf32, #tpu.memory_space<smem>>
    %276 = vector.extract_strided_slice %273 {offsets = [0, 0, 0], sizes = [1, 8, 128], strides = [1, 1, 1]} : vector<4x8x128xf32> to vector<1x8x128xf32>
    %277 = vector.shape_cast %276 : vector<1x8x128xf32> to vector<8x128xf32>
    %278 = vector.broadcast %275 : f32 to vector<8x128xf32>
    %279 = arith.mulf %278, %277 : vector<8x128xf32>
    %280 = arith.addf %274, %279 : vector<8x128xf32>
    %c1 = arith.constant 1 : index
    %281 = memref.load %arg8[%c1] : memref<4xf32, #tpu.memory_space<smem>>
    %282 = vector.extract_strided_slice %273 {offsets = [1, 0, 0], sizes = [1, 8, 128], strides = [1, 1, 1]} : vector<4x8x128xf32> to vector<1x8x128xf32>
    %283 = vector.shape_cast %282 : vector<1x8x128xf32> to vector<8x128xf32>
    %284 = vector.broadcast %281 : f32 to vector<8x128xf32>
    %285 = arith.mulf %284, %283 : vector<8x128xf32>
    %286 = arith.addf %280, %285 : vector<8x128xf32>
    %c2 = arith.constant 2 : index
    %287 = memref.load %arg8[%c2] : memref<4xf32, #tpu.memory_space<smem>>
    %288 = vector.extract_strided_slice %273 {offsets = [2, 0, 0], sizes = [1, 8, 128], strides = [1, 1, 1]} : vector<4x8x128xf32> to vector<1x8x128xf32>
    %289 = vector.shape_cast %288 : vector<1x8x128xf32> to vector<8x128xf32>
    %290 = vector.broadcast %287 : f32 to vector<8x128xf32>
    %291 = arith.mulf %290, %289 : vector<8x128xf32>
    %292 = arith.addf %286, %291 : vector<8x128xf32>
    %c3 = arith.constant 3 : index
    %293 = memref.load %arg8[%c3] : memref<4xf32, #tpu.memory_space<smem>>
    %294 = vector.extract_strided_slice %273 {offsets = [3, 0, 0], sizes = [1, 8, 128], strides = [1, 1, 1]} : vector<4x8x128xf32> to vector<1x8x128xf32>
    %295 = vector.shape_cast %294 : vector<1x8x128xf32> to vector<8x128xf32>
    %296 = vector.broadcast %293 : f32 to vector<8x128xf32>
    %297 = arith.mulf %296, %295 : vector<8x128xf32>
    %298 = arith.addf %292, %297 : vector<8x128xf32>
    %c0_83 = arith.constant 0 : index
    %c0_84 = arith.constant 0 : index
    %299 = vector.load %arg6[%c0_83, %c0_84] : memref<128x128xf32, #tpu.memory_space<vmem>>, vector<128x128xf32>
    %cst_85 = arith.constant dense<0.000000e+00> : vector<8x128xf32>
    %300 = tpu.matmul %268, %299, %cst_85 {dimension_numbers = #tpu.dot_dimension_numbers<[1], [0], [0], [1], [0, 0, 1, 1], [], []>} : vector<8x128xf32>, vector<128x128xf32>, vector<8x128xf32> -> vector<8x128xf32>
    %c0_86 = arith.constant 0 : index
    %c0_87 = arith.constant 0 : index
    %301 = vector.load %arg7[%c0_86, %c0_87] : memref<1x128xf32, #tpu.memory_space<vmem>>, vector<1x128xf32>
    %302 = vector.broadcast %301 : vector<1x128xf32> to vector<8x128xf32>
    %303 = arith.addf %300, %302 : vector<8x128xf32>
    %cst_88 = arith.constant 1.000000e+00 : f32
    %304 = vector.broadcast %cst_88 : f32 to vector<8x128xf32>
    %305 = arith.mulf %303, %304 : vector<8x128xf32>
    %306 = arith.addf %305, %298 : vector<8x128xf32>
    %c0_89 = arith.constant 0 : index
    %307 = memref.load %arg9[%c0_89] : memref<1xf32, #tpu.memory_space<smem>>
    %308 = vector.broadcast %307 : f32 to vector<8x128xf32>
    %309 = arith.addf %306, %308 : vector<8x128xf32>
    %c0_90 = arith.constant 0 : index
    %c0_91 = arith.constant 0 : index
    %310 = vector.load %arg10[%c0_90, %c0_91] : memref<8x128xf32, #tpu.memory_space<vmem>>, vector<8x128xf32>
    tpu.vector_store %arg10[%c0_90, %c0_91], %309 {strides = array<i32>} : memref<8x128xf32, #tpu.memory_space<vmem>>, vector<8x128xf32>,
    return
  }
}

</mosaic_0001>

<llo_original>
// kernel: tpu_custom_call.1
$region0: #{tpu_custom_call.1}
  #allocation0 [shape = 'u32[]', space=smem, size = 0x4, offset = 0x4, fixed_abs, tag = 'smem constant byte address 0x4 - core index']
  #allocation1 [shape = 'u32[144,128]{1,0:T(1,128)}', space=vmem, size = 0x12000, scoped, tag = 'internal scratch']
  #allocation2 [shape = 'f32[8,8,384]{2,1,0:T(8,128)}', space=vmem, size = 0x18000, scoped, tag = 'scratch operand']
  #allocation3 [shape = 'f32[1]{0:T(128)S(6)}', space=smem, size = 0x200, scoped, tag = 'scoped memory for tpu_custom_call.1']
  %s0 = inlined_call_operand.hbm [shape: f32[8,8,128], index: 0, kind: input, shape index: {}]
  %s1 = inlined_call_operand.hbm [shape: f32[128,128], index: 1, kind: input, shape index: {}]
  %s2 = inlined_call_operand.hbm [shape: f32[128,384], index: 2, kind: input, shape index: {}]
  %s3 = inlined_call_operand.vmem [shape: f32[1,384], index: 3, kind: input, shape index: {}]
  %s4 = inlined_call_operand.hbm [shape: f32[128,384], index: 4, kind: input, shape index: {}]
  %s5 = inlined_call_operand.vmem [shape: f32[1,128], index: 5, kind: input, shape index: {}]
  %s6 = inlined_call_operand.hbm [shape: f32[128,128], index: 6, kind: input, shape index: {}]
  %s7 = inlined_call_operand.vmem [shape: f32[1,128], index: 7, kind: input, shape index: {}]
  %s8 = inlined_call_operand.vmem [shape: f32[4], index: 8, kind: input, shape index: {}]
  %s9 = inlined_call_operand.<no memory space> [shape: f32[1], index: 9, kind: input, shape index: {}]
  %s10 = inlined_call_operand.hbm [shape: f32[8,128], index: 10, kind: output, shape index: {}]
  %s11 = sld [smem:[#allocation0]]
  $region74: #{tpu_custom_call.1} parent=0
    _
  %s13 = ssub.s32 1, %s11
  %s14 = scalar_select 0, %s13, %s11
  %15 = sst [smem:[#allocation3]] %s9
  $region1: #{tpu_custom_call.1} parent=0
    #allocation4 [shape = 'u8[32768]{0}', space=vmem, size = 0x8000, scoped, tag = 'input window, operand 0, single buffered']
    #allocation5 [shape = 's32[1]{0}', space=sflag, size = 0x4, scoped, tag = 'scoped memory for tpu_custom_call.1']
    #allocation6 [shape = 's32[1]{0}', space=sflag, size = 0x4, scoped, tag = 'scoped memory for tpu_custom_call.1']
    #allocation7 [shape = 's32[1]{0}', space=sflag, size = 0x4, scoped, tag = 'scoped memory for tpu_custom_call.1']
    #allocation8 [shape = 'u8[65536]{0}', space=vmem, size = 0x10000, scoped, tag = 'input window, operand 1, single buffered']
    #allocation9 [shape = 's32[1]{0}', space=sflag, size = 0x4, scoped, tag = 'scoped memory for tpu_custom_call.1']
    #allocation10 [shape = 'u8[196608]{0}', space=vmem, size = 0x30000, scoped, tag = 'input window, operand 2, single buffered']
    #allocation11 [shape = 'u8[196608]{0}', space=vmem, size = 0x30000, scoped, tag = 'input window, operand 4, single buffered']
    #allocation12 [shape = 's32[1]{0}', space=sflag, size = 0x4, scoped, tag = 'scoped memory for tpu_custom_call.1']
    #allocation13 [shape = 'u8[65536]{0}', space=vmem, size = 0x10000, scoped, tag = 'input window, operand 6, single buffered']
    #allocation14 [shape = 'u8[512]{0}', space=smem, size = 0x200, scoped, tag = 'input window, operand 8, single buffered']
    #allocation15 [shape = 'u8[4096]{0}', space=vmem, size = 0x1000, scoped, tag = 'output window, operand 0, single buffered']
    %16 = vsyncpa [#allocation5], 0
    %17 = vsyncpa [#allocation9], 0
    %18 = vsyncpa [#allocation12], 0
    %19 = vsyncpa [#allocation7], 0
    %20 = vsyncpa [#allocation6], 0
    // Predicated region
    $region2: #{tpu_custom_call.1} parent=1 // pred_check
      _
    $region3: #{tpu_custom_call.1} parent=1 // pred_check_branch
      %22 = sbr.rel (0) target = $region5
    $region4: #{tpu_custom_call.1} parent=1 // pred_region
      %s24 = ssub.s32 1024, 1024
      %25 = vsyncadd [#allocation5], %s24
      %s26 = sshll.u32 [#allocation4], 4
      %s27 = int_to_ptr.vmem [resolvable:$true] %s26
      %32 = dma.hbm_to_vmem [thread:$0]  %s0, 1024, %s27, [#allocation5], 128, 128, 8
    $region5: #{tpu_custom_call.1} parent=1 // pred_fallthru
      _
    // Predicated region
    $region6: #{tpu_custom_call.1} parent=1 // pred_check
      _
    $region7: #{tpu_custom_call.1} parent=1 // pred_check_branch
      %34 = sbr.rel (0) target = $region9
    $region8: #{tpu_custom_call.1} parent=1 // pred_region
      %s36 = ssub.s32 2048, 2048
      %37 = vsyncadd [#allocation9], %s36
      %s38 = sshll.u32 [#allocation8], 4
      %s39 = int_to_ptr.vmem [resolvable:$true] %s38
      %44 = dma.hbm_to_vmem [thread:$0]  %s1, 2048, %s39, [#allocation9], 128, 128, 8
    $region9: #{tpu_custom_call.1} parent=1 // pred_fallthru
      _
    // Predicated region
    $region10: #{tpu_custom_call.1} parent=1 // pred_check
      _
    $region11: #{tpu_custom_call.1} parent=1 // pred_check_branch
      %46 = sbr.rel (0) target = $region13
    $region12: #{tpu_custom_call.1} parent=1 // pred_region
      %s48 = ssub.s32 6144, 6144
      %49 = vsyncadd [#allocation9], %s48
      %s50 = sshll.u32 [#allocation10], 4
      %s51 = int_to_ptr.vmem [resolvable:$true] %s50
      %56 = dma.hbm_to_vmem [thread:$0]  %s2, 6144, %s51, [#allocation9], 384, 384, 24
    $region13: #{tpu_custom_call.1} parent=1 // pred_fallthru
      _
    // Predicated region
    $region14: #{tpu_custom_call.1} parent=1 // pred_check
      _
    $region15: #{tpu_custom_call.1} parent=1 // pred_check_branch
      %58 = sbr.rel (0) target = $region17
    $region16: #{tpu_custom_call.1} parent=1 // pred_region
      _
    $region17: #{tpu_custom_call.1} parent=1 // pred_fallthru
      _
    // Predicated region
    $region18: #{tpu_custom_call.1} parent=1 // pred_check
      _
    $region19: #{tpu_custom_call.1} parent=1 // pred_check_branch
      %60 = sbr.rel (0) target = $region21
    $region20: #{tpu_custom_call.1} parent=1 // pred_region
      %s62 = ssub.s32 6144, 6144
      %63 = vsyncadd [#allocation12], %s62
      %s64 = sshll.u32 [#allocation11], 4
      %s65 = int_to_ptr.vmem [resolvable:$true] %s64
      %70 = dma.hbm_to_vmem [thread:$0]  %s4, 6144, %s65, [#allocation12], 384, 384, 24
    $region21: #{tpu_custom_call.1} parent=1 // pred_fallthru
      _
    // Predicated region
    $region22: #{tpu_custom_call.1} parent=1 // pred_check
      _
    $region23: #{tpu_custom_call.1} parent=1 // pred_check_branch
      %72 = sbr.rel (0) target = $region25
    $region24: #{tpu_custom_call.1} parent=1 // pred_region
      _
    $region25: #{tpu_custom_call.1} parent=1 // pred_fallthru
      _
    // Predicated region
    $region26: #{tpu_custom_call.1} parent=1 // pred_check
      _
    $region27: #{tpu_custom_call.1} parent=1 // pred_check_branch
      %74 = sbr.rel (0) target = $region29
    $region28: #{tpu_custom_call.1} parent=1 // pred_region
      %s76 = ssub.s32 2048, 2048
      %77 = vsyncadd [#allocation12], %s76
      %s78 = sshll.u32 [#allocation13], 4
      %s79 = int_to_ptr.vmem [resolvable:$true] %s78
      %84 = dma.hbm_to_vmem [thread:$0]  %s6, 2048, %s79, [#allocation12], 128, 128, 8
    $region29: #{tpu_custom_call.1} parent=1 // pred_fallthru
      _
    // Predicated region
    $region30: #{tpu_custom_call.1} parent=1 // pred_check
      _
    $region31: #{tpu_custom_call.1} parent=1 // pred_check_branch
      %86 = sbr.rel (0) target = $region33
    $region32: #{tpu_custom_call.1} parent=1 // pred_region
      _
    $region33: #{tpu_custom_call.1} parent=1 // pred_fallthru
      _
    // Predicated region
    $region34: #{tpu_custom_call.1} parent=1 // pred_check
      _
    $region35: #{tpu_custom_call.1} parent=1 // pred_check_branch
      %88 = sbr.rel (0) target = $region37
    $region36: #{tpu_custom_call.1} parent=1 // pred_region
      %s90 = ssub.s32 16, 16
      %91 = vsyncadd [#allocation7], %s90
      %s93 = sshll.u32 %s8, 4
      %s94 = int_to_ptr.vmem [resolvable:$true] %s93
      %96 = dma.vmem_to_smem %s94, 16, [#allocation14], [#allocation7]
    $region37: #{tpu_custom_call.1} parent=1 // pred_fallthru
      _
    // Predicated region
    $region38: #{tpu_custom_call.1} parent=1 // pred_check
      _
    $region39: #{tpu_custom_call.1} parent=1 // pred_check_branch
      %98 = sbr.rel (0) target = $region41
    $region40: #{tpu_custom_call.1} parent=1 // pred_region
      _
    $region41: #{tpu_custom_call.1} parent=1 // pred_fallthru
      _
    // Predicated region
    $region42: #{tpu_custom_call.1} parent=1 // pred_check
      _
    $region43: #{tpu_custom_call.1} parent=1 // pred_check_branch
      %100 = sbr.rel (0) target = $region45
    $region44: #{tpu_custom_call.1} parent=1 // pred_region
      %101 = dma.done [#allocation5], 1024
    $region45: #{tpu_custom_call.1} parent=1 // pred_fallthru
      _
    // Predicated region
    $region46: #{tpu_custom_call.1} parent=1 // pred_check
      _
    $region47: #{tpu_custom_call.1} parent=1 // pred_check_branch
      %103 = sbr.rel (0) target = $region49
    $region48: #{tpu_custom_call.1} parent=1 // pred_region
      %104 = dma.done [#allocation9], 2048
    $region49: #{tpu_custom_call.1} parent=1 // pred_fallthru
      _
    // Predicated region
    $region50: #{tpu_custom_call.1} parent=1 // pred_check
      _
    $region51: #{tpu_custom_call.1} parent=1 // pred_check_branch
      %106 = sbr.rel (0) target = $region53
    $region52: #{tpu_custom_call.1} parent=1 // pred_region
      %107 = dma.done [#allocation9], 6144
    $region53: #{tpu_custom_call.1} parent=1 // pred_fallthru
      _
    // Predicated region
    $region54: #{tpu_custom_call.1} parent=1 // pred_check
      _
    $region55: #{tpu_custom_call.1} parent=1 // pred_check_branch
      %109 = sbr.rel (0) target = $region57
    $region56: #{tpu_custom_call.1} parent=1 // pred_region
      %110 = dma.done [#allocation12], 6144
    $region57: #{tpu_custom_call.1} parent=1 // pred_fallthru
      _
    // Predicated region
    $region58: #{tpu_custom_call.1} parent=1 // pred_check
      _
    $region59: #{tpu_custom_call.1} parent=1 // pred_check_branch
      %112 = sbr.rel (0) target = $region61
    $region60: #{tpu_custom_call.1} parent=1 // pred_region
      %113 = dma.done [#allocation12], 2048
    $region61: #{tpu_custom_call.1} parent=1 // pred_fallthru
      _
    // Predicated region
    $region62: #{tpu_custom_call.1} parent=1 // pred_check
      _
    $region63: #{tpu_custom_call.1} parent=1 // pred_check_branch
      %115 = sbr.rel (0) target = $region65
    $region64: #{tpu_custom_call.1} parent=1 // pred_region
      %116 = dma.done [#allocation7], 16
    $region65: #{tpu_custom_call.1} parent=1 // pred_fallthru
      _
    %117 = sfence
    %v118 = vld [vmem:[#allocation4] sm:$0xff]
    %v119 = vld [vmem:[#allocation4 + $0x8] sm:$0xff]
    %v120 = vld [vmem:[#allocation4 + $0x10] sm:$0xff]
    %v121 = vld [vmem:[#allocation4 + $0x18] sm:$0xff]
    %v122 = vld [vmem:[#allocation4 + $0x20] sm:$0xff]
    %v123 = vld [vmem:[#allocation4 + $0x28] sm:$0xff]
    %v124 = vld [vmem:[#allocation4 + $0x30] sm:$0xff]
    %v125 = vld [vmem:[#allocation4 + $0x38] sm:$0xff]
    %v126 = vld [vmem:[#allocation10] sm:$0xff]
    %v127 = vld [vmem:[#allocation10 + $0x8] sm:$0xff]
    %v128 = vld [vmem:[#allocation10 + $0x10] sm:$0xff]
    %v129 = vld [vmem:[#allocation10 + $0x18] sm:$0xff]
    %v130 = vld [vmem:[#allocation10 + $0x20] sm:$0xff]
    %v131 = vld [vmem:[#allocation10 + $0x28] sm:$0xff]
    %v132 = vld [vmem:[#allocation10 + $0x30] sm:$0xff]
    %v133 = vld [vmem:[#allocation10 + $0x38] sm:$0xff]
    %v134 = vld [vmem:[#allocation10 + $0x40] sm:$0xff]
    %v135 = vld [vmem:[#allocation10 + $0x48] sm:$0xff]
    %v136 = vld [vmem:[#allocation10 + $0x50] sm:$0xff]
    %v137 = vld [vmem:[#allocation10 + $0x58] sm:$0xff]
    %v138 = vld [vmem:[#allocation10 + $0x60] sm:$0xff]
    %v139 = vld [vmem:[#allocation10 + $0x68] sm:$0xff]
    %v140 = vld [vmem:[#allocation10 + $0x70] sm:$0xff]
    %v141 = vld [vmem:[#allocation10 + $0x78] sm:$0xff]
    %v142 = vld [vmem:[#allocation10 + $0x80] sm:$0xff]
    %v143 = vld [vmem:[#allocation10 + $0x88] sm:$0xff]
    %v144 = vld [vmem:[#allocation10 + $0x90] sm:$0xff]
    %v145 = vld [vmem:[#allocation10 + $0x98] sm:$0xff]
    %v146 = vld [vmem:[#allocation10 + $0xa0] sm:$0xff]
    %v147 = vld [vmem:[#allocation10 + $0xa8] sm:$0xff]
    %v148 = vld [vmem:[#allocation10 + $0xb0] sm:$0xff]
    %v149 = vld [vmem:[#allocation10 + $0xb8] sm:$0xff]
    %v150 = vld [vmem:[#allocation10 + $0xc0] sm:$0xff]
    %v151 = vld [vmem:[#allocation10 + $0xc8] sm:$0xff]
    %v152 = vld [vmem:[#allocation10 + $0xd0] sm:$0xff]
    %v153 = vld [vmem:[#allocation10 + $0xd8] sm:$0xff]
    %v154 = vld [vmem:[#allocation10 + $0xe0] sm:$0xff]
    %v155 = vld [vmem:[#allocation10 + $0xe8] sm:$0xff]
    %v156 = vld [vmem:[#allocation10 + $0xf0] sm:$0xff]
    %v157 = vld [vmem:[#allocation10 + $0xf8] sm:$0xff]
    %v158 = vld [vmem:[#allocation10 + $0x100] sm:$0xff]
    %v159 = vld [vmem:[#allocation10 + $0x108] sm:$0xff]
    %v160 = vld [vmem:[#allocation10 + $0x110] sm:$0xff]
    %v161 = vld [vmem:[#allocation10 + $0x118] sm:$0xff]
    %v162 = vld [vmem:[#allocation10 + $0x120] sm:$0xff]
    %v163 = vld [vmem:[#allocation10 + $0x128] sm:$0xff]
    %v164 = vld [vmem:[#allocation10 + $0x130] sm:$0xff]
    %v165 = vld [vmem:[#allocation10 + $0x138] sm:$0xff]
    %v166 = vld [vmem:[#allocation10 + $0x140] sm:$0xff]
    %v167 = vld [vmem:[#allocation10 + $0x148] sm:$0xff]
    %v168 = vld [vmem:[#allocation10 + $0x150] sm:$0xff]
    %v169 = vld [vmem:[#allocation10 + $0x158] sm:$0xff]
    %v170 = vld [vmem:[#allocation10 + $0x160] sm:$0xff]
    %v171 = vld [vmem:[#allocation10 + $0x168] sm:$0xff]
    %v172 = vld [vmem:[#allocation10 + $0x170] sm:$0xff]
    %v173 = vld [vmem:[#allocation10 + $0x178] sm:$0xff]
    %v174 = vld [vmem:[%s3] sm:$0x7]
    %v176 = vlaneseq
    %v177 = vshrl.u32 %v176, 7
    %v178 = vsub.s32 0, %v177
    %v179 = vrot.slane %v174, %v178
    %v180 = vlaneseq
    %v181 = vshrl.u32 %v180, 7
    %v182 = vsub.s32 1, %v181
    %v183 = vrot.slane %v174, %v182
    %v184 = vlaneseq
    %v185 = vshrl.u32 %v184, 7
    %v186 = vsub.s32 2, %v185
    %v187 = vrot.slane %v174, %v186
    %191 = vmatprep.subr.mxu0 %v127
    %192 = vmatpush1.msra.mxu0 %v126
    %193 = vmatprep.subr.mxu0 %v130
    %194 = vmatpush1.msra.mxu0 %v129
    %195 = vmatprep.subr.mxu0 %v133
    %196 = vmatpush1.msra.mxu0 %v132
    %197 = vmatprep.subr.mxu0 %v136
    %198 = vmatpush1.msra.mxu0 %v135
    %199 = vmatprep.subr.mxu0 %v139
    %200 = vmatpush1.msra.mxu0 %v138
    %201 = vmatprep.subr.mxu0 %v142
    %202 = vmatpush1.msra.mxu0 %v141
    %203 = vmatprep.subr.mxu0 %v145
    %204 = vmatpush1.msra.mxu0 %v144
    %205 = vmatprep.subr.mxu0 %v148
    %206 = vmatpush1.msra.mxu0 %v147
    %207 = vmatprep.subr.mxu0 %v151
    %208 = vmatpush1.msra.mxu0 %v150
    %209 = vmatprep.subr.mxu0 %v154
    %210 = vmatpush1.msra.mxu0 %v153
    %211 = vmatprep.subr.mxu0 %v157
    %212 = vmatpush1.msra.mxu0 %v156
    %213 = vmatprep.subr.mxu0 %v160
    %214 = vmatpush1.msra.mxu0 %v159
    %215 = vmatprep.subr.mxu0 %v163
    %216 = vmatpush1.msra.mxu0 %v162
    %217 = vmatprep.subr.mxu0 %v166
    %218 = vmatpush1.msra.mxu0 %v165
    %219 = vmatprep.subr.mxu0 %v169
    %220 = vmatpush1.msra.mxu0 %v168
    %221 = vmatprep.subr.mxu0 %v172
    %222 = vmatpush1.msra.mxu0 %v171
    %223 = vmatprep.subr.mxu0 0.0
    %224 = vmatpush1.msra.mxu0 0.0
    %225 = vmatprep.subr.mxu0 0.0
    %226 = vmatpush1.msra.mxu0 0.0
    %227 = vmatprep.subr.mxu0 0.0
    %228 = vmatpush1.msra.mxu0 0.0
    %229 = vmatprep.subr.mxu0 0.0
    %230 = vmatpush1.msra.mxu0 0.0
    %231 = vmatprep.subr.mxu0 0.0
    %232 = vmatpush1.msra.mxu0 0.0
    %233 = vmatprep.subr.mxu0 0.0
    %234 = vmatpush1.msra.mxu0 0.0
    %235 = vmatprep.subr.mxu0 0.0
    %236 = vmatpush1.msra.mxu0 0.0
    %237 = vmatprep.subr.mxu0 0.0
    %238 = vmatpush1.msra.mxu0 0.0
    %239 = vmatprep.subr.mxu0 0.0
    %240 = vmatpush1.msra.mxu0 0.0
    %241 = vmatprep.subr.mxu0 0.0
    %242 = vmatpush1.msra.mxu0 0.0
    %243 = vmatprep.subr.mxu0 0.0
    %244 = vmatpush1.msra.mxu0 0.0
    %245 = vmatprep.subr.mxu0 0.0
    %246 = vmatpush1.msra.mxu0 0.0
    %247 = vmatprep.subr.mxu0 0.0
    %248 = vmatpush1.msra.mxu0 0.0
    %249 = vmatprep.subr.mxu0 0.0
    %250 = vmatpush1.msra.mxu0 0.0
    %251 = vmatprep.subr.mxu0 0.0
    %252 = vmatpush1.msra.mxu0 0.0
    %253 = vmatprep.subr.mxu0 0.0
    %254 = vmatpush1.msra.mxu0 0.0
    %255 = vmatprep.mubr.f32.mxu0 0.0
    %256 = vmatmul.mubr.f32.gmra.mrb[0].mxu0 %v118
    %v257 = vpop.f32.mrb[0].mxu0
    %v258 = vadd.f32 %v179, %v257
    %v259 = vpop.f32.mrb[0].mxu0
    %v260 = vadd.f32 %v183, %v259
    %261 = vmatprep.mubr.f32.mxu0 0.0
    %262 = vmatmul.mubr.f32.gmra.mrb[0].mxu0 %v119
    %v263 = vpop.f32.mrb[0].mxu0
    %v264 = vadd.f32 %v179, %v263
    %v265 = vpop.f32.mrb[0].mxu0
    %v266 = vadd.f32 %v183, %v265
    %267 = vmatprep.mubr.f32.mxu0 0.0
    %268 = vmatmul.mubr.f32.gmra.mrb[0].mxu0 %v120
    %v269 = vpop.f32.mrb[0].mxu0
    %v270 = vadd.f32 %v179, %v269
    %v271 = vpop.f32.mrb[0].mxu0
    %v272 = vadd.f32 %v183, %v271
    %273 = vmatprep.mubr.f32.mxu0 0.0
    %274 = vmatmul.mubr.f32.gmra.mrb[0].mxu0 %v121
    %v275 = vpop.f32.mrb[0].mxu0
    %v276 = vadd.f32 %v179, %v275
    %v277 = vpop.f32.mrb[0].mxu0
    %v278 = vadd.f32 %v183, %v277
    %279 = vmatprep.mubr.f32.mxu0 0.0
    %280 = vmatmul.mubr.f32.gmra.mrb[0].mxu0 %v122
    %v281 = vpop.f32.mrb[0].mxu0
    %v282 = vadd.f32 %v179, %v281
    %v283 = vpop.f32.mrb[0].mxu0
    %v284 = vadd.f32 %v183, %v283
    %285 = vmatprep.mubr.f32.mxu0 0.0
    %286 = vmatmul.mubr.f32.gmra.mrb[0].mxu0 %v123
    %v287 = vpop.f32.mrb[0].mxu0
    %v288 = vadd.f32 %v179, %v287
    %v289 = vpop.f32.mrb[0].mxu0
    %v290 = vadd.f32 %v183, %v289
    %291 = vmatprep.mubr.f32.mxu0 0.0
    %292 = vmatmul.mubr.f32.gmra.mrb[0].mxu0 %v124
    %v293 = vpop.f32.mrb[0].mxu0
    %v294 = vadd.f32 %v179, %v293
    %v295 = vpop.f32.mrb[0].mxu0
    %v296 = vadd.f32 %v183, %v295
    %297 = vmatprep.mubr.f32.mxu0 0.0
    %298 = vmatmul.mubr.f32.gmra.mrb[0].mxu0 %v125
    %v299 = vpop.f32.mrb[0].mxu0
    %v300 = vadd.f32 %v179, %v299
    %v301 = vpop.f32.mrb[0].mxu0
    %v302 = vadd.f32 %v183, %v301
    %303 = vdwg.mxu0
    %304 = vmatprep.subr.mxu0 0.0
    %305 = vmatpush1.msra.mxu0 %v128
    %306 = vmatprep.subr.mxu0 0.0
    %307 = vmatpush1.msra.mxu0 %v131
    %308 = vmatprep.subr.mxu0 0.0
    %309 = vmatpush1.msra.mxu0 %v134
    %310 = vmatprep.subr.mxu0 0.0
    %311 = vmatpush1.msra.mxu0 %v137
    %312 = vmatprep.subr.mxu0 0.0
    %313 = vmatpush1.msra.mxu0 %v140
    %314 = vmatprep.subr.mxu0 0.0
    %315 = vmatpush1.msra.mxu0 %v143
    %316 = vmatprep.subr.mxu0 0.0
    %317 = vmatpush1.msra.mxu0 %v146
    %318 = vmatprep.subr.mxu0 0.0
    %319 = vmatpush1.msra.mxu0 %v149
    %320 = vmatprep.subr.mxu0 0.0
    %321 = vmatpush1.msra.mxu0 %v152
    %322 = vmatprep.subr.mxu0 0.0
    %323 = vmatpush1.msra.mxu0 %v155
    %324 = vmatprep.subr.mxu0 0.0
    %325 = vmatpush1.msra.mxu0 %v158
    %326 = vmatprep.subr.mxu0 0.0
    %327 = vmatpush1.msra.mxu0 %v161
    %328 = vmatprep.subr.mxu0 0.0
    %329 = vmatpush1.msra.mxu0 %v164
    %330 = vmatprep.subr.mxu0 0.0
    %331 = vmatpush1.msra.mxu0 %v167
    %332 = vmatprep.subr.mxu0 0.0
    %333 = vmatpush1.msra.mxu0 %v170
    %334 = vmatprep.subr.mxu0 0.0
    %335 = vmatpush1.msra.mxu0 %v173
    %336 = vmatprep.subr.mxu0 0.0
    %337 = vmatpush1.msra.mxu0 0.0
    %338 = vmatprep.subr.mxu0 0.0
    %339 = vmatpush1.msra.mxu0 0.0
    %340 = vmatprep.subr.mxu0 0.0
    %341 = vmatpush1.msra.mxu0 0.0
    %342 = vmatprep.subr.mxu0 0.0
    %343 = vmatpush1.msra.mxu0 0.0
    %344 = vmatprep.subr.mxu0 0.0
    %345 = vmatpush1.msra.mxu0 0.0
    %346 = vmatprep.subr.mxu0 0.0
    %347 = vmatpush1.msra.mxu0 0.0
    %348 = vmatprep.subr.mxu0 0.0
    %349 = vmatpush1.msra.mxu0 0.0
    %350 = vmatprep.subr.mxu0 0.0
    %351 = vmatpush1.msra.mxu0 0.0
    %352 = vmatprep.subr.mxu0 0.0
    %353 = vmatpush1.msra.mxu0 0.0
    %354 = vmatprep.subr.mxu0 0.0
    %355 = vmatpush1.msra.mxu0 0.0
    %356 = vmatprep.subr.mxu0 0.0
    %357 = vmatpush1.msra.mxu0 0.0
    %358 = vmatprep.subr.mxu0 0.0
    %359 = vmatpush1.msra.mxu0 0.0
    %360 = vmatprep.subr.mxu0 0.0
    %361 = vmatpush1.msra.mxu0 0.0
    %362 = vmatprep.subr.mxu0 0.0
    %363 = vmatpush1.msra.mxu0 0.0
    %364 = vmatprep.subr.mxu0 0.0
    %365 = vmatpush1.msra.mxu0 0.0
    %366 = vmatprep.subr.mxu0 0.0
    %367 = vmatpush1.msra.mxu0 0.0
    %368 = vmatprep.mubr.f32.mxu0 0.0
    %369 = vmatmul.mubr.f32.gmra.mrb[0].mxu0 %v118
    %v370 = vpop.f32.mrb[0].mxu0
    %v371 = vadd.f32 %v187, %v370
    %v372 = vpop.f32.mrb[0].mxu0
    %373 = vmatprep.mubr.f32.mxu0 0.0
    %374 = vmatmul.mubr.f32.gmra.mrb[0].mxu0 %v119
    %v375 = vpop.f32.mrb[0].mxu0
    %v376 = vadd.f32 %v187, %v375
    %v377 = vpop.f32.mrb[0].mxu0
    %378 = vmatprep.mubr.f32.mxu0 0.0
    %379 = vmatmul.mubr.f32.gmra.mrb[0].mxu0 %v120
    %v380 = vpop.f32.mrb[0].mxu0
    %v381 = vadd.f32 %v187, %v380
    %v382 = vpop.f32.mrb[0].mxu0
    %383 = vmatprep.mubr.f32.mxu0 0.0
    %384 = vmatmul.mubr.f32.gmra.mrb[0].mxu0 %v121
    %v385 = vpop.f32.mrb[0].mxu0
    %v386 = vadd.f32 %v187, %v385
    %v387 = vpop.f32.mrb[0].mxu0
    %388 = vmatprep.mubr.f32.mxu0 0.0
    %389 = vmatmul.mubr.f32.gmra.mrb[0].mxu0 %v122
    %v390 = vpop.f32.mrb[0].mxu0
    %v391 = vadd.f32 %v187, %v390
    %v392 = vpop.f32.mrb[0].mxu0
    %393 = vmatprep.mubr.f32.mxu0 0.0
    %394 = vmatmul.mubr.f32.gmra.mrb[0].mxu0 %v123
    %v395 = vpop.f32.mrb[0].mxu0
    %v396 = vadd.f32 %v187, %v395
    %v397 = vpop.f32.mrb[0].mxu0
    %398 = vmatprep.mubr.f32.mxu0 0.0
    %399 = vmatmul.mubr.f32.gmra.mrb[0].mxu0 %v124
    %v400 = vpop.f32.mrb[0].mxu0
    %v401 = vadd.f32 %v187, %v400
    %v402 = vpop.f32.mrb[0].mxu0
    %403 = vmatprep.mubr.f32.mxu0 0.0
    %404 = vmatmul.mubr.f32.gmra.mrb[0].mxu0 %v125
    %v405 = vpop.f32.mrb[0].mxu0
    %v406 = vadd.f32 %v187, %v405
    %v407 = vpop.f32.mrb[0].mxu0
    %408 = vdwg.mxu0
    %409 = vst [vmem:[#allocation2] sm:$0xff] %v258
    %410 = vst [vmem:[#allocation2 + $0x8] sm:$0xff] %v260
    %411 = vst [vmem:[#allocation2 + $0x10] sm:$0xff] %v371
    %412 = vst [vmem:[#allocation2 + $0x18] sm:$0xff] %v264
    %413 = vst [vmem:[#allocation2 + $0x20] sm:$0xff] %v266
    %414 = vst [vmem:[#allocation2 + $0x28] sm:$0xff] %v376
    %415 = vst [vmem:[#allocation2 + $0x30] sm:$0xff] %v270
    %416 = vst [vmem:[#allocation2 + $0x38] sm:$0xff] %v272
    %417 = vst [vmem:[#allocation2 + $0x40] sm:$0xff] %v381
    %418 = vst [vmem:[#allocation2 + $0x48] sm:$0xff] %v276
    %419 = vst [vmem:[#allocation2 + $0x50] sm:$0xff] %v278
    %420 = vst [vmem:[#allocation2 + $0x58] sm:$0xff] %v386
    %421 = vst [vmem:[#allocation2 + $0x60] sm:$0xff] %v282
    %422 = vst [vmem:[#allocation2 + $0x68] sm:$0xff] %v284
    %423 = vst [vmem:[#allocation2 + $0x70] sm:$0xff] %v391
    %424 = vst [vmem:[#allocation2 + $0x78] sm:$0xff] %v288
    %425 = vst [vmem:[#allocation2 + $0x80] sm:$0xff] %v290
    %426 = vst [vmem:[#allocation2 + $0x88] sm:$0xff] %v396
    %427 = vst [vmem:[#allocation2 + $0x90] sm:$0xff] %v294
    %428 = vst [vmem:[#allocation2 + $0x98] sm:$0xff] %v296
    %429 = vst [vmem:[#allocation2 + $0xa0] sm:$0xff] %v401
    %430 = vst [vmem:[#allocation2 + $0xa8] sm:$0xff] %v300
    %431 = vst [vmem:[#allocation2 + $0xb0] sm:$0xff] %v302
    %432 = vst [vmem:[#allocation2 + $0xb8] sm:$0xff] %v406
    %v433 = vld [vmem:[%s5] sm:$0x1]
    %v435 = vlaneseq
    %v436 = vshrl.u32 %v435, 7
    %v437 = vsub.s32 0, %v436
    %v438 = vrot.slane %v433, %v437
    %v440 = vld [vmem:[#allocation2] sm:$0xff]
    %v441 = vld [vmem:[#allocation2 + $0x8] sm:$0xff]
    %v442 = vld [vmem:[#allocation2 + $0x10] sm:$0xff]
    %v443 = vld [vmem:[#allocation11] sm:$0xff]
    %v444 = vld [vmem:[#allocation11 + $0x8] sm:$0xff]
    %v445 = vld [vmem:[#allocation11 + $0x10] sm:$0xff]
    %v446 = vld [vmem:[#allocation11 + $0x18] sm:$0xff]
    %v447 = vld [vmem:[#allocation11 + $0x20] sm:$0xff]
    %v448 = vld [vmem:[#allocation11 + $0x28] sm:$0xff]
    %v449 = vld [vmem:[#allocation11 + $0x30] sm:$0xff]
    %v450 = vld [vmem:[#allocation11 + $0x38] sm:$0xff]
    %v451 = vld [vmem:[#allocation11 + $0x40] sm:$0xff]
    %v452 = vld [vmem:[#allocation11 + $0x48] sm:$0xff]
    %v453 = vld [vmem:[#allocation11 + $0x50] sm:$0xff]
    %v454 = vld [vmem:[#allocation11 + $0x58] sm:$0xff]
    %v455 = vld [vmem:[#allocation11 + $0x60] sm:$0xff]
    %v456 = vld [vmem:[#allocation11 + $0x68] sm:$0xff]
    %v457 = vld [vmem:[#allocation11 + $0x70] sm:$0xff]
    %v458 = vld [vmem:[#allocation11 + $0x78] sm:$0xff]
    %v459 = vld [vmem:[#allocation11 + $0x80] sm:$0xff]
    %v460 = vld [vmem:[#allocation11 + $0x88] sm:$0xff]
    %v461 = vld [vmem:[#allocation11 + $0x90] sm:$0xff]
    %v462 = vld [vmem:[#allocation11 + $0x98] sm:$0xff]
    %v463 = vld [vmem:[#allocation11 + $0xa0] sm:$0xff]
    %v464 = vld [vmem:[#allocation11 + $0xa8] sm:$0xff]
    %v465 = vld [vmem:[#allocation11 + $0xb0] sm:$0xff]
    %v466 = vld [vmem:[#allocation11 + $0xb8] sm:$0xff]
    %v467 = vld [vmem:[#allocation11 + $0xc0] sm:$0xff]
    %v468 = vld [vmem:[#allocation11 + $0xc8] sm:$0xff]
    %v469 = vld [vmem:[#allocation11 + $0xd0] sm:$0xff]
    %v470 = vld [vmem:[#allocation11 + $0xd8] sm:$0xff]
    %v471 = vld [vmem:[#allocation11 + $0xe0] sm:$0xff]
    %v472 = vld [vmem:[#allocation11 + $0xe8] sm:$0xff]
    %v473 = vld [vmem:[#allocation11 + $0xf0] sm:$0xff]
    %v474 = vld [vmem:[#allocation11 + $0xf8] sm:$0xff]
    %v475 = vld [vmem:[#allocation11 + $0x100] sm:$0xff]
    %v476 = vld [vmem:[#allocation11 + $0x108] sm:$0xff]
    %v477 = vld [vmem:[#allocation11 + $0x110] sm:$0xff]
    %v478 = vld [vmem:[#allocation11 + $0x118] sm:$0xff]
    %v479 = vld [vmem:[#allocation11 + $0x120] sm:$0xff]
    %v480 = vld [vmem:[#allocation11 + $0x128] sm:$0xff]
    %v481 = vld [vmem:[#allocation11 + $0x130] sm:$0xff]
    %v482 = vld [vmem:[#allocation11 + $0x138] sm:$0xff]
    %v483 = vld [vmem:[#allocation11 + $0x140] sm:$0xff]
    %v484 = vld [vmem:[#allocation11 + $0x148] sm:$0xff]
    %v485 = vld [vmem:[#allocation11 + $0x150] sm:$0xff]
    %v486 = vld [vmem:[#allocation11 + $0x158] sm:$0xff]
    %v487 = vld [vmem:[#allocation11 + $0x160] sm:$0xff]
    %v488 = vld [vmem:[#allocation11 + $0x168] sm:$0xff]
    %v489 = vld [vmem:[#allocation11 + $0x170] sm:$0xff]
    %v490 = vld [vmem:[#allocation11 + $0x178] sm:$0xff]
    %491 = vmatprep.subr.mxu0 %v444
    %492 = vmatpush1.msra.mxu0 %v443
    %493 = vmatprep.subr.mxu0 %v447
    %494 = vmatpush1.msra.mxu0 %v446
    %495 = vmatprep.subr.mxu0 %v450
    %496 = vmatpush1.msra.mxu0 %v449
    %497 = vmatprep.subr.mxu0 %v453
    %498 = vmatpush1.msra.mxu0 %v452
    %499 = vmatprep.subr.mxu0 %v456
    %500 = vmatpush1.msra.mxu0 %v455
    %501 = vmatprep.subr.mxu0 %v459
    %502 = vmatpush1.msra.mxu0 %v458
    %503 = vmatprep.subr.mxu0 %v462
    %504 = vmatpush1.msra.mxu0 %v461
    %505 = vmatprep.subr.mxu0 %v465
    %506 = vmatpush1.msra.mxu0 %v464
    %507 = vmatprep.subr.mxu0 %v468
    %508 = vmatpush1.msra.mxu0 %v467
    %509 = vmatprep.subr.mxu0 %v471
    %510 = vmatpush1.msra.mxu0 %v470
    %511 = vmatprep.subr.mxu0 %v474
    %512 = vmatpush1.msra.mxu0 %v473
    %513 = vmatprep.subr.mxu0 %v477
    %514 = vmatpush1.msra.mxu0 %v476
    %515 = vmatprep.subr.mxu0 %v480
    %516 = vmatpush1.msra.mxu0 %v479
    %517 = vmatprep.subr.mxu0 %v483
    %518 = vmatpush1.msra.mxu0 %v482
    %519 = vmatprep.subr.mxu0 %v486
    %520 = vmatpush1.msra.mxu0 %v485
    %521 = vmatprep.subr.mxu0 %v489
    %522 = vmatpush1.msra.mxu0 %v488
    %523 = vmatprep.subr.mxu0 0.0
    %524 = vmatpush1.msra.mxu0 0.0
    %525 = vmatprep.subr.mxu0 0.0
    %526 = vmatpush1.msra.mxu0 0.0
    %527 = vmatprep.subr.mxu0 0.0
    %528 = vmatpush1.msra.mxu0 0.0
    %529 = vmatprep.subr.mxu0 0.0
    %530 = vmatpush1.msra.mxu0 0.0
    %531 = vmatprep.subr.mxu0 0.0
    %532 = vmatpush1.msra.mxu0 0.0
    %533 = vmatprep.subr.mxu0 0.0
    %534 = vmatpush1.msra.mxu0 0.0
    %535 = vmatprep.subr.mxu0 0.0
    %536 = vmatpush1.msra.mxu0 0.0
    %537 = vmatprep.subr.mxu0 0.0
    %538 = vmatpush1.msra.mxu0 0.0
    %539 = vmatprep.subr.mxu0 0.0
    %540 = vmatpush1.msra.mxu0 0.0
    %541 = vmatprep.subr.mxu0 0.0
    %542 = vmatpush1.msra.mxu0 0.0
    %543 = vmatprep.subr.mxu0 0.0
    %544 = vmatpush1.msra.mxu0 0.0
    %545 = vmatprep.subr.mxu0 0.0
    %546 = vmatpush1.msra.mxu0 0.0
    %547 = vmatprep.subr.mxu0 0.0
    %548 = vmatpush1.msra.mxu0 0.0
    %549 = vmatprep.subr.mxu0 0.0
    %550 = vmatpush1.msra.mxu0 0.0
    %551 = vmatprep.subr.mxu0 0.0
    %552 = vmatpush1.msra.mxu0 0.0
    %553 = vmatprep.subr.mxu0 0.0
    %554 = vmatpush1.msra.mxu0 0.0
    %555 = vmatprep.mubr.f32.mxu0 0.0
    %556 = vmatmul.mubr.f32.gmra.mrb[0].mxu0 0.0
    %v557 = vpop.f32.mrb[0].mxu0
    %v558 = vadd.f32 0.0, %v557
    %v559 = vpop.f32.mrb[0].mxu0
    %v560 = vadd.f32 0.0, %v559
    %561 = vdwg.mxu0
    %562 = vmatprep.subr.mxu0 0.0
    %563 = vmatpush1.msra.mxu0 %v445
    %564 = vmatprep.subr.mxu0 0.0
    %565 = vmatpush1.msra.mxu0 %v448
    %566 = vmatprep.subr.mxu0 0.0
    %567 = vmatpush1.msra.mxu0 %v451
    %568 = vmatprep.subr.mxu0 0.0
    %569 = vmatpush1.msra.mxu0 %v454
    %570 = vmatprep.subr.mxu0 0.0
    %571 = vmatpush1.msra.mxu0 %v457
    %572 = vmatprep.subr.mxu0 0.0
    %573 = vmatpush1.msra.mxu0 %v460
    %574 = vmatprep.subr.mxu0 0.0
    %575 = vmatpush1.msra.mxu0 %v463
    %576 = vmatprep.subr.mxu0 0.0
    %577 = vmatpush1.msra.mxu0 %v466
    %578 = vmatprep.subr.mxu0 0.0
    %579 = vmatpush1.msra.mxu0 %v469
    %580 = vmatprep.subr.mxu0 0.0
    %581 = vmatpush1.msra.mxu0 %v472
    %582 = vmatprep.subr.mxu0 0.0
    %583 = vmatpush1.msra.mxu0 %v475
    %584 = vmatprep.subr.mxu0 0.0
    %585 = vmatpush1.msra.mxu0 %v478
    %586 = vmatprep.subr.mxu0 0.0
    %587 = vmatpush1.msra.mxu0 %v481
    %588 = vmatprep.subr.mxu0 0.0
    %589 = vmatpush1.msra.mxu0 %v484
    %590 = vmatprep.subr.mxu0 0.0
    %591 = vmatpush1.msra.mxu0 %v487
    %592 = vmatprep.subr.mxu0 0.0
    %593 = vmatpush1.msra.mxu0 %v490
    %594 = vmatprep.subr.mxu0 0.0
    %595 = vmatpush1.msra.mxu0 0.0
    %596 = vmatprep.subr.mxu0 0.0
    %597 = vmatpush1.msra.mxu0 0.0
    %598 = vmatprep.subr.mxu0 0.0
    %599 = vmatpush1.msra.mxu0 0.0
    %600 = vmatprep.subr.mxu0 0.0
    %601 = vmatpush1.msra.mxu0 0.0
    %602 = vmatprep.subr.mxu0 0.0
    %603 = vmatpush1.msra.mxu0 0.0
    %604 = vmatprep.subr.mxu0 0.0
    %605 = vmatpush1.msra.mxu0 0.0
    %606 = vmatprep.subr.mxu0 0.0
    %607 = vmatpush1.msra.mxu0 0.0
    %608 = vmatprep.subr.mxu0 0.0
    %609 = vmatpush1.msra.mxu0 0.0
    %610 = vmatprep.subr.mxu0 0.0
    %611 = vmatpush1.msra.mxu0 0.0
    %612 = vmatprep.subr.mxu0 0.0
    %613 = vmatpush1.msra.mxu0 0.0
    %614 = vmatprep.subr.mxu0 0.0
    %615 = vmatpush1.msra.mxu0 0.0
    %616 = vmatprep.subr.mxu0 0.0
    %617 = vmatpush1.msra.mxu0 0.0
    %618 = vmatprep.subr.mxu0 0.0
    %619 = vmatpush1.msra.mxu0 0.0
    %620 = vmatprep.subr.mxu0 0.0
    %621 = vmatpush1.msra.mxu0 0.0
    %622 = vmatprep.subr.mxu0 0.0
    %623 = vmatpush1.msra.mxu0 0.0
    %624 = vmatprep.subr.mxu0 0.0
    %625 = vmatpush1.msra.mxu0 0.0
    %626 = vmatprep.mubr.f32.mxu0 0.0
    %627 = vmatmul.mubr.f32.gmra.mrb[0].mxu0 0.0
    %v628 = vpop.f32.mrb[0].mxu0
    %v629 = vadd.f32 0.0, %v628
    %v630 = vpop.f32.mrb[0].mxu0
    %631 = vdwg.mxu0
    %v632 = vadd.f32 %v440, %v558
    %v633 = vxor.u32 %v632, 2147483648
    %v634 = vmul.f32 %v633, 1.442695
    %v635 = vpow.pop %v634
    %v636 = vadd.f32 %v635, 1.0
    %v637 = vrcp.pop %v636
    %v638 = vmul.f32 1.0, %v637
    %v639 = vadd.f32 %v441, %v560
    %v640 = vxor.u32 %v639, 2147483648
    %v641 = vmul.f32 %v640, 1.442695
    %v642 = vpow.pop %v641
    %v643 = vadd.f32 %v642, 1.0
    %v644 = vrcp.pop %v643
    %v645 = vmul.f32 1.0, %v644
    %v646 = vadd.f32 %v629, %v438
    %v647 = vmul.f32 %v638, %v646
    %v648 = vadd.f32 %v442, %v647
    %v649 = vtanh.pop %v648
    %v650 = vsub.f32 1.0, %v645
    %v651 = vmul.f32 %v650, %v649
    %v652 = vmul.f32 %v645, 0.0
    %v653 = vadd.f32 %v651, %v652
    %s654 = scalar_lea.vmem [#allocation2], 24
    %v655 = vld [vmem:[%s654] sm:$0xff]
    %v656 = vld [vmem:[%s654 + $0x8] sm:$0xff]
    %v657 = vld [vmem:[%s654 + $0x10] sm:$0xff]
    %658 = vmatprep.subr.mxu0 %v444
    %659 = vmatpush1.msra.mxu0 %v443
    %660 = vmatprep.subr.mxu0 %v447
    %661 = vmatpush1.msra.mxu0 %v446
    %662 = vmatprep.subr.mxu0 %v450
    %663 = vmatpush1.msra.mxu0 %v449
    %664 = vmatprep.subr.mxu0 %v453
    %665 = vmatpush1.msra.mxu0 %v452
    %666 = vmatprep.subr.mxu0 %v456
    %667 = vmatpush1.msra.mxu0 %v455
    %668 = vmatprep.subr.mxu0 %v459
    %669 = vmatpush1.msra.mxu0 %v458
    %670 = vmatprep.subr.mxu0 %v462
    %671 = vmatpush1.msra.mxu0 %v461
    %672 = vmatprep.subr.mxu0 %v465
    %673 = vmatpush1.msra.mxu0 %v464
    %674 = vmatprep.subr.mxu0 %v468
    %675 = vmatpush1.msra.mxu0 %v467
    %676 = vmatprep.subr.mxu0 %v471
    %677 = vmatpush1.msra.mxu0 %v470
    %678 = vmatprep.subr.mxu0 %v474
    %679 = vmatpush1.msra.mxu0 %v473
    %680 = vmatprep.subr.mxu0 %v477
    %681 = vmatpush1.msra.mxu0 %v476
    %682 = vmatprep.subr.mxu0 %v480
    %683 = vmatpush1.msra.mxu0 %v479
    %684 = vmatprep.subr.mxu0 %v483
    %685 = vmatpush1.msra.mxu0 %v482
    %686 = vmatprep.subr.mxu0 %v486
    %687 = vmatpush1.msra.mxu0 %v485
    %688 = vmatprep.subr.mxu0 %v489
    %689 = vmatpush1.msra.mxu0 %v488
    %690 = vmatprep.subr.mxu0 0.0
    %691 = vmatpush1.msra.mxu0 0.0
    %692 = vmatprep.subr.mxu0 0.0
    %693 = vmatpush1.msra.mxu0 0.0
    %694 = vmatprep.subr.mxu0 0.0
    %695 = vmatpush1.msra.mxu0 0.0
    %696 = vmatprep.subr.mxu0 0.0
    %697 = vmatpush1.msra.mxu0 0.0
    %698 = vmatprep.subr.mxu0 0.0
    %699 = vmatpush1.msra.mxu0 0.0
    %700 = vmatprep.subr.mxu0 0.0
    %701 = vmatpush1.msra.mxu0 0.0
    %702 = vmatprep.subr.mxu0 0.0
    %703 = vmatpush1.msra.mxu0 0.0
    %704 = vmatprep.subr.mxu0 0.0
    %705 = vmatpush1.msra.mxu0 0.0
    %706 = vmatprep.subr.mxu0 0.0
    %707 = vmatpush1.msra.mxu0 0.0
    %708 = vmatprep.subr.mxu0 0.0
    %709 = vmatpush1.msra.mxu0 0.0
    %710 = vmatprep.subr.mxu0 0.0
    %711 = vmatpush1.msra.mxu0 0.0
    %712 = vmatprep.subr.mxu0 0.0
    %713 = vmatpush1.msra.mxu0 0.0
    %714 = vmatprep.subr.mxu0 0.0
    %715 = vmatpush1.msra.mxu0 0.0
    %716 = vmatprep.subr.mxu0 0.0
    %717 = vmatpush1.msra.mxu0 0.0
    %718 = vmatprep.subr.mxu0 0.0
    %719 = vmatpush1.msra.mxu0 0.0
    %720 = vmatprep.subr.mxu0 0.0
    %721 = vmatpush1.msra.mxu0 0.0
    %722 = vmatprep.mubr.f32.mxu0 0.0
    %723 = vmatmul.mubr.f32.gmra.mrb[0].mxu0 %v653
    %v724 = vpop.f32.mrb[0].mxu0
    %v725 = vadd.f32 0.0, %v724
    %v726 = vpop.f32.mrb[0].mxu0
    %v727 = vadd.f32 0.0, %v726
    %728 = vdwg.mxu0
    %729 = vmatprep.subr.mxu0 0.0
    %730 = vmatpush1.msra.mxu0 %v445
    %731 = vmatprep.subr.mxu0 0.0
    %732 = vmatpush1.msra.mxu0 %v448
    %733 = vmatprep.subr.mxu0 0.0
    %734 = vmatpush1.msra.mxu0 %v451
    %735 = vmatprep.subr.mxu0 0.0
    %736 = vmatpush1.msra.mxu0 %v454
    %737 = vmatprep.subr.mxu0 0.0
    %738 = vmatpush1.msra.mxu0 %v457
    %739 = vmatprep.subr.mxu0 0.0
    %740 = vmatpush1.msra.mxu0 %v460
    %741 = vmatprep.subr.mxu0 0.0
    %742 = vmatpush1.msra.mxu0 %v463
    %743 = vmatprep.subr.mxu0 0.0
    %744 = vmatpush1.msra.mxu0 %v466
    %745 = vmatprep.subr.mxu0 0.0
    %746 = vmatpush1.msra.mxu0 %v469
    %747 = vmatprep.subr.mxu0 0.0
    %748 = vmatpush1.msra.mxu0 %v472
    %749 = vmatprep.subr.mxu0 0.0
    %750 = vmatpush1.msra.mxu0 %v475
    %751 = vmatprep.subr.mxu0 0.0
    %752 = vmatpush1.msra.mxu0 %v478
    %753 = vmatprep.subr.mxu0 0.0
    %754 = vmatpush1.msra.mxu0 %v481
    %755 = vmatprep.subr.mxu0 0.0
    %756 = vmatpush1.msra.mxu0 %v484
    %757 = vmatprep.subr.mxu0 0.0
    %758 = vmatpush1.msra.mxu0 %v487
    %759 = vmatprep.subr.mxu0 0.0
    %760 = vmatpush1.msra.mxu0 %v490
    %761 = vmatprep.subr.mxu0 0.0
    %762 = vmatpush1.msra.mxu0 0.0
    %763 = vmatprep.subr.mxu0 0.0
    %764 = vmatpush1.msra.mxu0 0.0
    %765 = vmatprep.subr.mxu0 0.0
    %766 = vmatpush1.msra.mxu0 0.0
    %767 = vmatprep.subr.mxu0 0.0
    %768 = vmatpush1.msra.mxu0 0.0
    %769 = vmatprep.subr.mxu0 0.0
    %770 = vmatpush1.msra.mxu0 0.0
    %771 = vmatprep.subr.mxu0 0.0
    %772 = vmatpush1.msra.mxu0 0.0
    %773 = vmatprep.subr.mxu0 0.0
    %774 = vmatpush1.msra.mxu0 0.0
    %775 = vmatprep.subr.mxu0 0.0
    %776 = vmatpush1.msra.mxu0 0.0
    %777 = vmatprep.subr.mxu0 0.0
    %778 = vmatpush1.msra.mxu0 0.0
    %779 = vmatprep.subr.mxu0 0.0
    %780 = vmatpush1.msra.mxu0 0.0
    %781 = vmatprep.subr.mxu0 0.0
    %782 = vmatpush1.msra.mxu0 0.0
    %783 = vmatprep.subr.mxu0 0.0
    %784 = vmatpush1.msra.mxu0 0.0
    %785 = vmatprep.subr.mxu0 0.0
    %786 = vmatpush1.msra.mxu0 0.0
    %787 = vmatprep.subr.mxu0 0.0
    %788 = vmatpush1.msra.mxu0 0.0
    %789 = vmatprep.subr.mxu0 0.0
    %790 = vmatpush1.msra.mxu0 0.0
    %791 = vmatprep.subr.mxu0 0.0
    %792 = vmatpush1.msra.mxu0 0.0
    %793 = vmatprep.mubr.f32.mxu0 0.0
    %794 = vmatmul.mubr.f32.gmra.mrb[0].mxu0 %v653
    %v795 = vpop.f32.mrb[0].mxu0
    %v796 = vadd.f32 0.0, %v795
    %v797 = vpop.f32.mrb[0].mxu0
    %798 = vdwg.mxu0
    %v799 = vadd.f32 %v655, %v725
    %v800 = vxor.u32 %v799, 2147483648
    %v801 = vmul.f32 %v800, 1.442695
    %v802 = vpow.pop %v801
    %v803 = vadd.f32 %v802, 1.0
    %v804 = vrcp.pop %v803
    %v805 = vmul.f32 1.0, %v804
    %v806 = vadd.f32 %v656, %v727
    %v807 = vxor.u32 %v806, 2147483648
    %v808 = vmul.f32 %v807, 1.442695
    %v809 = vpow.pop %v808
    %v810 = vadd.f32 %v809, 1.0
    %v811 = vrcp.pop %v810
    %v812 = vmul.f32 1.0, %v811
    %v813 = vadd.f32 %v796, %v438
    %v814 = vmul.f32 %v805, %v813
    %v815 = vadd.f32 %v657, %v814
    %v816 = vtanh.pop %v815
    %v817 = vsub.f32 1.0, %v812
    %v818 = vmul.f32 %v817, %v816
    %v819 = vmul.f32 %v812, %v653
    %v820 = vadd.f32 %v818, %v819
    %s821 = scalar_lea.vmem [#allocation2], 48
    %v822 = vld [vmem:[%s821] sm:$0xff]
    %v823 = vld [vmem:[%s821 + $0x8] sm:$0xff]
    %v824 = vld [vmem:[%s821 + $0x10] sm:$0xff]
    %825 = vmatprep.subr.mxu0 %v444
    %826 = vmatpush1.msra.mxu0 %v443
    %827 = vmatprep.subr.mxu0 %v447
    %828 = vmatpush1.msra.mxu0 %v446
    %829 = vmatprep.subr.mxu0 %v450
    %830 = vmatpush1.msra.mxu0 %v449
    %831 = vmatprep.subr.mxu0 %v453
    %832 = vmatpush1.msra.mxu0 %v452
    %833 = vmatprep.subr.mxu0 %v456
    %834 = vmatpush1.msra.mxu0 %v455
    %835 = vmatprep.subr.mxu0 %v459
    %836 = vmatpush1.msra.mxu0 %v458
    %837 = vmatprep.subr.mxu0 %v462
    %838 = vmatpush1.msra.mxu0 %v461
    %839 = vmatprep.subr.mxu0 %v465
    %840 = vmatpush1.msra.mxu0 %v464
    %841 = vmatprep.subr.mxu0 %v468
    %842 = vmatpush1.msra.mxu0 %v467
    %843 = vmatprep.subr.mxu0 %v471
    %844 = vmatpush1.msra.mxu0 %v470
    %845 = vmatprep.subr.mxu0 %v474
    %846 = vmatpush1.msra.mxu0 %v473
    %847 = vmatprep.subr.mxu0 %v477
    %848 = vmatpush1.msra.mxu0 %v476
    %849 = vmatprep.subr.mxu0 %v480
    %850 = vmatpush1.msra.mxu0 %v479
    %851 = vmatprep.subr.mxu0 %v483
    %852 = vmatpush1.msra.mxu0 %v482
    %853 = vmatprep.subr.mxu0 %v486
    %854 = vmatpush1.msra.mxu0 %v485
    %855 = vmatprep.subr.mxu0 %v489
    %856 = vmatpush1.msra.mxu0 %v488
    %857 = vmatprep.subr.mxu0 0.0
    %858 = vmatpush1.msra.mxu0 0.0
    %859 = vmatprep.subr.mxu0 0.0
    %860 = vmatpush1.msra.mxu0 0.0
    %861 = vmatprep.subr.mxu0 0.0
    %862 = vmatpush1.msra.mxu0 0.0
    %863 = vmatprep.subr.mxu0 0.0
    %864 = vmatpush1.msra.mxu0 0.0
    %865 = vmatprep.subr.mxu0 0.0
    %866 = vmatpush1.msra.mxu0 0.0
    %867 = vmatprep.subr.mxu0 0.0
    %868 = vmatpush1.msra.mxu0 0.0
    %869 = vmatprep.subr.mxu0 0.0
    %870 = vmatpush1.msra.mxu0 0.0
    %871 = vmatprep.subr.mxu0 0.0
    %872 = vmatpush1.msra.mxu0 0.0
    %873 = vmatprep.subr.mxu0 0.0
    %874 = vmatpush1.msra.mxu0 0.0
    %875 = vmatprep.subr.mxu0 0.0
    %876 = vmatpush1.msra.mxu0 0.0
    %877 = vmatprep.subr.mxu0 0.0
    %878 = vmatpush1.msra.mxu0 0.0
    %879 = vmatprep.subr.mxu0 0.0
    %880 = vmatpush1.msra.mxu0 0.0
    %881 = vmatprep.subr.mxu0 0.0
    %882 = vmatpush1.msra.mxu0 0.0
    %883 = vmatprep.subr.mxu0 0.0
    %884 = vmatpush1.msra.mxu0 0.0
    %885 = vmatprep.subr.mxu0 0.0
    %886 = vmatpush1.msra.mxu0 0.0
    %887 = vmatprep.subr.mxu0 0.0
    %888 = vmatpush1.msra.mxu0 0.0
    %889 = vmatprep.mubr.f32.mxu0 0.0
    %890 = vmatmul.mubr.f32.gmra.mrb[0].mxu0 %v820
    %v891 = vpop.f32.mrb[0].mxu0
    %v892 = vadd.f32 0.0, %v891
    %v893 = vpop.f32.mrb[0].mxu0
    %v894 = vadd.f32 0.0, %v893
    %895 = vdwg.mxu0
    %896 = vmatprep.subr.mxu0 0.0
    %897 = vmatpush1.msra.mxu0 %v445
    %898 = vmatprep.subr.mxu0 0.0
    %899 = vmatpush1.msra.mxu0 %v448
    %900 = vmatprep.subr.mxu0 0.0
    %901 = vmatpush1.msra.mxu0 %v451
    %902 = vmatprep.subr.mxu0 0.0
    %903 = vmatpush1.msra.mxu0 %v454
    %904 = vmatprep.subr.mxu0 0.0
    %905 = vmatpush1.msra.mxu0 %v457
    %906 = vmatprep.subr.mxu0 0.0
    %907 = vmatpush1.msra.mxu0 %v460
    %908 = vmatprep.subr.mxu0 0.0
    %909 = vmatpush1.msra.mxu0 %v463
    %910 = vmatprep.subr.mxu0 0.0
    %911 = vmatpush1.msra.mxu0 %v466
    %912 = vmatprep.subr.mxu0 0.0
    %913 = vmatpush1.msra.mxu0 %v469
    %914 = vmatprep.subr.mxu0 0.0
    %915 = vmatpush1.msra.mxu0 %v472
    %916 = vmatprep.subr.mxu0 0.0
    %917 = vmatpush1.msra.mxu0 %v475
    %918 = vmatprep.subr.mxu0 0.0
    %919 = vmatpush1.msra.mxu0 %v478
    %920 = vmatprep.subr.mxu0 0.0
    %921 = vmatpush1.msra.mxu0 %v481
    %922 = vmatprep.subr.mxu0 0.0
    %923 = vmatpush1.msra.mxu0 %v484
    %924 = vmatprep.subr.mxu0 0.0
    %925 = vmatpush1.msra.mxu0 %v487
    %926 = vmatprep.subr.mxu0 0.0
    %927 = vmatpush1.msra.mxu0 %v490
    %928 = vmatprep.subr.mxu0 0.0
    %929 = vmatpush1.msra.mxu0 0.0
    %930 = vmatprep.subr.mxu0 0.0
    %931 = vmatpush1.msra.mxu0 0.0
    %932 = vmatprep.subr.mxu0 0.0
    %933 = vmatpush1.msra.mxu0 0.0
    %934 = vmatprep.subr.mxu0 0.0
    %935 = vmatpush1.msra.mxu0 0.0
    %936 = vmatprep.subr.mxu0 0.0
    %937 = vmatpush1.msra.mxu0 0.0
    %938 = vmatprep.subr.mxu0 0.0
    %939 = vmatpush1.msra.mxu0 0.0
    %940 = vmatprep.subr.mxu0 0.0
    %941 = vmatpush1.msra.mxu0 0.0
    %942 = vmatprep.subr.mxu0 0.0
    %943 = vmatpush1.msra.mxu0 0.0
    %944 = vmatprep.subr.mxu0 0.0
    %945 = vmatpush1.msra.mxu0 0.0
    %946 = vmatprep.subr.mxu0 0.0
    %947 = vmatpush1.msra.mxu0 0.0
    %948 = vmatprep.subr.mxu0 0.0
    %949 = vmatpush1.msra.mxu0 0.0
    %950 = vmatprep.subr.mxu0 0.0
    %951 = vmatpush1.msra.mxu0 0.0
    %952 = vmatprep.subr.mxu0 0.0
    %953 = vmatpush1.msra.mxu0 0.0
    %954 = vmatprep.subr.mxu0 0.0
    %955 = vmatpush1.msra.mxu0 0.0
    %956 = vmatprep.subr.mxu0 0.0
    %957 = vmatpush1.msra.mxu0 0.0
    %958 = vmatprep.subr.mxu0 0.0
    %959 = vmatpush1.msra.mxu0 0.0
    %960 = vmatprep.mubr.f32.mxu0 0.0
    %961 = vmatmul.mubr.f32.gmra.mrb[0].mxu0 %v820
    %v962 = vpop.f32.mrb[0].mxu0
    %v963 = vadd.f32 0.0, %v962
    %v964 = vpop.f32.mrb[0].mxu0
    %965 = vdwg.mxu0
    %v966 = vadd.f32 %v822, %v892
    %v967 = vxor.u32 %v966, 2147483648
    %v968 = vmul.f32 %v967, 1.442695
    %v969 = vpow.pop %v968
    %v970 = vadd.f32 %v969, 1.0
    %v971 = vrcp.pop %v970
    %v972 = vmul.f32 1.0, %v971
    %v973 = vadd.f32 %v823, %v894
    %v974 = vxor.u32 %v973, 2147483648
    %v975 = vmul.f32 %v974, 1.442695
    %v976 = vpow.pop %v975
    %v977 = vadd.f32 %v976, 1.0
    %v978 = vrcp.pop %v977
    %v979 = vmul.f32 1.0, %v978
    %v980 = vadd.f32 %v963, %v438
    %v981 = vmul.f32 %v972, %v980
    %v982 = vadd.f32 %v824, %v981
    %v983 = vtanh.pop %v982
    %v984 = vsub.f32 1.0, %v979
    %v985 = vmul.f32 %v984, %v983
    %v986 = vmul.f32 %v979, %v820
    %v987 = vadd.f32 %v985, %v986
    %s988 = scalar_lea.vmem [#allocation2], 72
    %v989 = vld [vmem:[%s988] sm:$0xff]
    %v990 = vld [vmem:[%s988 + $0x8] sm:$0xff]
    %v991 = vld [vmem:[%s988 + $0x10] sm:$0xff]
    %992 = vmatprep.subr.mxu0 %v444
    %993 = vmatpush1.msra.mxu0 %v443
    %994 = vmatprep.subr.mxu0 %v447
    %995 = vmatpush1.msra.mxu0 %v446
    %996 = vmatprep.subr.mxu0 %v450
    %997 = vmatpush1.msra.mxu0 %v449
    %998 = vmatprep.subr.mxu0 %v453
    %999 = vmatpush1.msra.mxu0 %v452
    %1000 = vmatprep.subr.mxu0 %v456
    %1001 = vmatpush1.msra.mxu0 %v455
    %1002 = vmatprep.subr.mxu0 %v459
    %1003 = vmatpush1.msra.mxu0 %v458
    %1004 = vmatprep.subr.mxu0 %v462
    %1005 = vmatpush1.msra.mxu0 %v461
    %1006 = vmatprep.subr.mxu0 %v465
    %1007 = vmatpush1.msra.mxu0 %v464
    %1008 = vmatprep.subr.mxu0 %v468
    %1009 = vmatpush1.msra.mxu0 %v467
    %1010 = vmatprep.subr.mxu0 %v471
    %1011 = vmatpush1.msra.mxu0 %v470
    %1012 = vmatprep.subr.mxu0 %v474
    %1013 = vmatpush1.msra.mxu0 %v473
    %1014 = vmatprep.subr.mxu0 %v477
    %1015 = vmatpush1.msra.mxu0 %v476
    %1016 = vmatprep.subr.mxu0 %v480
    %1017 = vmatpush1.msra.mxu0 %v479
    %1018 = vmatprep.subr.mxu0 %v483
    %1019 = vmatpush1.msra.mxu0 %v482
    %1020 = vmatprep.subr.mxu0 %v486
    %1021 = vmatpush1.msra.mxu0 %v485
    %1022 = vmatprep.subr.mxu0 %v489
    %1023 = vmatpush1.msra.mxu0 %v488
    %1024 = vmatprep.subr.mxu0 0.0
    %1025 = vmatpush1.msra.mxu0 0.0
    %1026 = vmatprep.subr.mxu0 0.0
    %1027 = vmatpush1.msra.mxu0 0.0
    %1028 = vmatprep.subr.mxu0 0.0
    %1029 = vmatpush1.msra.mxu0 0.0
    %1030 = vmatprep.subr.mxu0 0.0
    %1031 = vmatpush1.msra.mxu0 0.0
    %1032 = vmatprep.subr.mxu0 0.0
    %1033 = vmatpush1.msra.mxu0 0.0
    %1034 = vmatprep.subr.mxu0 0.0
    %1035 = vmatpush1.msra.mxu0 0.0
    %1036 = vmatprep.subr.mxu0 0.0
    %1037 = vmatpush1.msra.mxu0 0.0
    %1038 = vmatprep.subr.mxu0 0.0
    %1039 = vmatpush1.msra.mxu0 0.0
    %1040 = vmatprep.subr.mxu0 0.0
    %1041 = vmatpush1.msra.mxu0 0.0
    %1042 = vmatprep.subr.mxu0 0.0
    %1043 = vmatpush1.msra.mxu0 0.0
    %1044 = vmatprep.subr.mxu0 0.0
    %1045 = vmatpush1.msra.mxu0 0.0
    %1046 = vmatprep.subr.mxu0 0.0
    %1047 = vmatpush1.msra.mxu0 0.0
    %1048 = vmatprep.subr.mxu0 0.0
    %1049 = vmatpush1.msra.mxu0 0.0
    %1050 = vmatprep.subr.mxu0 0.0
    %1051 = vmatpush1.msra.mxu0 0.0
    %1052 = vmatprep.subr.mxu0 0.0
    %1053 = vmatpush1.msra.mxu0 0.0
    %1054 = vmatprep.subr.mxu0 0.0
    %1055 = vmatpush1.msra.mxu0 0.0
    %1056 = vmatprep.mubr.f32.mxu0 0.0
    %1057 = vmatmul.mubr.f32.gmra.mrb[0].mxu0 %v987
    %v1058 = vpop.f32.mrb[0].mxu0
    %v1059 = vadd.f32 0.0, %v1058
    %v1060 = vpop.f32.mrb[0].mxu0
    %v1061 = vadd.f32 0.0, %v1060
    %1062 = vdwg.mxu0
    %1063 = vmatprep.subr.mxu0 0.0
    %1064 = vmatpush1.msra.mxu0 %v445
    %1065 = vmatprep.subr.mxu0 0.0
    %1066 = vmatpush1.msra.mxu0 %v448
    %1067 = vmatprep.subr.mxu0 0.0
    %1068 = vmatpush1.msra.mxu0 %v451
    %1069 = vmatprep.subr.mxu0 0.0
    %1070 = vmatpush1.msra.mxu0 %v454
    %1071 = vmatprep.subr.mxu0 0.0
    %1072 = vmatpush1.msra.mxu0 %v457
    %1073 = vmatprep.subr.mxu0 0.0
    %1074 = vmatpush1.msra.mxu0 %v460
    %1075 = vmatprep.subr.mxu0 0.0
    %1076 = vmatpush1.msra.mxu0 %v463
    %1077 = vmatprep.subr.mxu0 0.0
    %1078 = vmatpush1.msra.mxu0 %v466
    %1079 = vmatprep.subr.mxu0 0.0
    %1080 = vmatpush1.msra.mxu0 %v469
    %1081 = vmatprep.subr.mxu0 0.0
    %1082 = vmatpush1.msra.mxu0 %v472
    %1083 = vmatprep.subr.mxu0 0.0
    %1084 = vmatpush1.msra.mxu0 %v475
    %1085 = vmatprep.subr.mxu0 0.0
    %1086 = vmatpush1.msra.mxu0 %v478
    %1087 = vmatprep.subr.mxu0 0.0
    %1088 = vmatpush1.msra.mxu0 %v481
    %1089 = vmatprep.subr.mxu0 0.0
    %1090 = vmatpush1.msra.mxu0 %v484
    %1091 = vmatprep.subr.mxu0 0.0
    %1092 = vmatpush1.msra.mxu0 %v487
    %1093 = vmatprep.subr.mxu0 0.0
    %1094 = vmatpush1.msra.mxu0 %v490
    %1095 = vmatprep.subr.mxu0 0.0
    %1096 = vmatpush1.msra.mxu0 0.0
    %1097 = vmatprep.subr.mxu0 0.0
    %1098 = vmatpush1.msra.mxu0 0.0
    %1099 = vmatprep.subr.mxu0 0.0
    %1100 = vmatpush1.msra.mxu0 0.0
    %1101 = vmatprep.subr.mxu0 0.0
    %1102 = vmatpush1.msra.mxu0 0.0
    %1103 = vmatprep.subr.mxu0 0.0
    %1104 = vmatpush1.msra.mxu0 0.0
    %1105 = vmatprep.subr.mxu0 0.0
    %1106 = vmatpush1.msra.mxu0 0.0
    %1107 = vmatprep.subr.mxu0 0.0
    %1108 = vmatpush1.msra.mxu0 0.0
    %1109 = vmatprep.subr.mxu0 0.0
    %1110 = vmatpush1.msra.mxu0 0.0
    %1111 = vmatprep.subr.mxu0 0.0
    %1112 = vmatpush1.msra.mxu0 0.0
    %1113 = vmatprep.subr.mxu0 0.0
    %1114 = vmatpush1.msra.mxu0 0.0
    %1115 = vmatprep.subr.mxu0 0.0
    %1116 = vmatpush1.msra.mxu0 0.0
    %1117 = vmatprep.subr.mxu0 0.0
    %1118 = vmatpush1.msra.mxu0 0.0
    %1119 = vmatprep.subr.mxu0 0.0
    %1120 = vmatpush1.msra.mxu0 0.0
    %1121 = vmatprep.subr.mxu0 0.0
    %1122 = vmatpush1.msra.mxu0 0.0
    %1123 = vmatprep.subr.mxu0 0.0
    %1124 = vmatpush1.msra.mxu0 0.0
    %1125 = vmatprep.subr.mxu0 0.0
    %1126 = vmatpush1.msra.mxu0 0.0
    %1127 = vmatprep.mubr.f32.mxu0 0.0
    %1128 = vmatmul.mubr.f32.gmra.mrb[0].mxu0 %v987
    %v1129 = vpop.f32.mrb[0].mxu0
    %v1130 = vadd.f32 0.0, %v1129
    %v1131 = vpop.f32.mrb[0].mxu0
    %1132 = vdwg.mxu0
    %v1133 = vadd.f32 %v989, %v1059
    %v1134 = vxor.u32 %v1133, 2147483648
    %v1135 = vmul.f32 %v1134, 1.442695
    %v1136 = vpow.pop %v1135
    %v1137 = vadd.f32 %v1136, 1.0
    %v1138 = vrcp.pop %v1137
    %v1139 = vmul.f32 1.0, %v1138
    %v1140 = vadd.f32 %v990, %v1061
    %v1141 = vxor.u32 %v1140, 2147483648
    %v1142 = vmul.f32 %v1141, 1.442695
    %v1143 = vpow.pop %v1142
    %v1144 = vadd.f32 %v1143, 1.0
    %v1145 = vrcp.pop %v1144
    %v1146 = vmul.f32 1.0, %v1145
    %v1147 = vadd.f32 %v1130, %v438
    %v1148 = vmul.f32 %v1139, %v1147
    %v1149 = vadd.f32 %v991, %v1148
    %v1150 = vtanh.pop %v1149
    %v1151 = vsub.f32 1.0, %v1146
    %v1152 = vmul.f32 %v1151, %v1150
    %v1153 = vmul.f32 %v1146, %v987
    %v1154 = vadd.f32 %v1152, %v1153
    %s1155 = scalar_lea.vmem [#allocation2], 96
    %v1156 = vld [vmem:[%s1155] sm:$0xff]
    %v1157 = vld [vmem:[%s1155 + $0x8] sm:$0xff]
    %v1158 = vld [vmem:[%s1155 + $0x10] sm:$0xff]
    %1159 = vmatprep.subr.mxu0 %v444
    %1160 = vmatpush1.msra.mxu0 %v443
    %1161 = vmatprep.subr.mxu0 %v447
    %1162 = vmatpush1.msra.mxu0 %v446
    %1163 = vmatprep.subr.mxu0 %v450
    %1164 = vmatpush1.msra.mxu0 %v449
    %1165 = vmatprep.subr.mxu0 %v453
    %1166 = vmatpush1.msra.mxu0 %v452
    %1167 = vmatprep.subr.mxu0 %v456
    %1168 = vmatpush1.msra.mxu0 %v455
    %1169 = vmatprep.subr.mxu0 %v459
    %1170 = vmatpush1.msra.mxu0 %v458
    %1171 = vmatprep.subr.mxu0 %v462
    %1172 = vmatpush1.msra.mxu0 %v461
    %1173 = vmatprep.subr.mxu0 %v465
    %1174 = vmatpush1.msra.mxu0 %v464
    %1175 = vmatprep.subr.mxu0 %v468
    %1176 = vmatpush1.msra.mxu0 %v467
    %1177 = vmatprep.subr.mxu0 %v471
    %1178 = vmatpush1.msra.mxu0 %v470
    %1179 = vmatprep.subr.mxu0 %v474
    %1180 = vmatpush1.msra.mxu0 %v473
    %1181 = vmatprep.subr.mxu0 %v477
    %1182 = vmatpush1.msra.mxu0 %v476
    %1183 = vmatprep.subr.mxu0 %v480
    %1184 = vmatpush1.msra.mxu0 %v479
    %1185 = vmatprep.subr.mxu0 %v483
    %1186 = vmatpush1.msra.mxu0 %v482
    %1187 = vmatprep.subr.mxu0 %v486
    %1188 = vmatpush1.msra.mxu0 %v485
    %1189 = vmatprep.subr.mxu0 %v489
    %1190 = vmatpush1.msra.mxu0 %v488
    %1191 = vmatprep.subr.mxu0 0.0
    %1192 = vmatpush1.msra.mxu0 0.0
    %1193 = vmatprep.subr.mxu0 0.0
    %1194 = vmatpush1.msra.mxu0 0.0
    %1195 = vmatprep.subr.mxu0 0.0
    %1196 = vmatpush1.msra.mxu0 0.0
    %1197 = vmatprep.subr.mxu0 0.0
    %1198 = vmatpush1.msra.mxu0 0.0
    %1199 = vmatprep.subr.mxu0 0.0
    %1200 = vmatpush1.msra.mxu0 0.0
    %1201 = vmatprep.subr.mxu0 0.0
    %1202 = vmatpush1.msra.mxu0 0.0
    %1203 = vmatprep.subr.mxu0 0.0
    %1204 = vmatpush1.msra.mxu0 0.0
    %1205 = vmatprep.subr.mxu0 0.0
    %1206 = vmatpush1.msra.mxu0 0.0
    %1207 = vmatprep.subr.mxu0 0.0
    %1208 = vmatpush1.msra.mxu0 0.0
    %1209 = vmatprep.subr.mxu0 0.0
    %1210 = vmatpush1.msra.mxu0 0.0
    %1211 = vmatprep.subr.mxu0 0.0
    %1212 = vmatpush1.msra.mxu0 0.0
    %1213 = vmatprep.subr.mxu0 0.0
    %1214 = vmatpush1.msra.mxu0 0.0
    %1215 = vmatprep.subr.mxu0 0.0
    %1216 = vmatpush1.msra.mxu0 0.0
    %1217 = vmatprep.subr.mxu0 0.0
    %1218 = vmatpush1.msra.mxu0 0.0
    %1219 = vmatprep.subr.mxu0 0.0
    %1220 = vmatpush1.msra.mxu0 0.0
    %1221 = vmatprep.subr.mxu0 0.0
    %1222 = vmatpush1.msra.mxu0 0.0
    %1223 = vmatprep.mubr.f32.mxu0 0.0
    %1224 = vmatmul.mubr.f32.gmra.mrb[0].mxu0 %v1154
    %v1225 = vpop.f32.mrb[0].mxu0
    %v1226 = vadd.f32 0.0, %v1225
    %v1227 = vpop.f32.mrb[0].mxu0
    %v1228 = vadd.f32 0.0, %v1227
    %1229 = vdwg.mxu0
    %1230 = vmatprep.subr.mxu0 0.0
    %1231 = vmatpush1.msra.mxu0 %v445
    %1232 = vmatprep.subr.mxu0 0.0
    %1233 = vmatpush1.msra.mxu0 %v448
    %1234 = vmatprep.subr.mxu0 0.0
    %1235 = vmatpush1.msra.mxu0 %v451
    %1236 = vmatprep.subr.mxu0 0.0
    %1237 = vmatpush1.msra.mxu0 %v454
    %1238 = vmatprep.subr.mxu0 0.0
    %1239 = vmatpush1.msra.mxu0 %v457
    %1240 = vmatprep.subr.mxu0 0.0
    %1241 = vmatpush1.msra.mxu0 %v460
    %1242 = vmatprep.subr.mxu0 0.0
    %1243 = vmatpush1.msra.mxu0 %v463
    %1244 = vmatprep.subr.mxu0 0.0
    %1245 = vmatpush1.msra.mxu0 %v466
    %1246 = vmatprep.subr.mxu0 0.0
    %1247 = vmatpush1.msra.mxu0 %v469
    %1248 = vmatprep.subr.mxu0 0.0
    %1249 = vmatpush1.msra.mxu0 %v472
    %1250 = vmatprep.subr.mxu0 0.0
    %1251 = vmatpush1.msra.mxu0 %v475
    %1252 = vmatprep.subr.mxu0 0.0
    %1253 = vmatpush1.msra.mxu0 %v478
    %1254 = vmatprep.subr.mxu0 0.0
    %1255 = vmatpush1.msra.mxu0 %v481
    %1256 = vmatprep.subr.mxu0 0.0
    %1257 = vmatpush1.msra.mxu0 %v484
    %1258 = vmatprep.subr.mxu0 0.0
    %1259 = vmatpush1.msra.mxu0 %v487
    %1260 = vmatprep.subr.mxu0 0.0
    %1261 = vmatpush1.msra.mxu0 %v490
    %1262 = vmatprep.subr.mxu0 0.0
    %1263 = vmatpush1.msra.mxu0 0.0
    %1264 = vmatprep.subr.mxu0 0.0
    %1265 = vmatpush1.msra.mxu0 0.0
    %1266 = vmatprep.subr.mxu0 0.0
    %1267 = vmatpush1.msra.mxu0 0.0
    %1268 = vmatprep.subr.mxu0 0.0
    %1269 = vmatpush1.msra.mxu0 0.0
    %1270 = vmatprep.subr.mxu0 0.0
    %1271 = vmatpush1.msra.mxu0 0.0
    %1272 = vmatprep.subr.mxu0 0.0
    %1273 = vmatpush1.msra.mxu0 0.0
    %1274 = vmatprep.subr.mxu0 0.0
    %1275 = vmatpush1.msra.mxu0 0.0
    %1276 = vmatprep.subr.mxu0 0.0
    %1277 = vmatpush1.msra.mxu0 0.0
    %1278 = vmatprep.subr.mxu0 0.0
    %1279 = vmatpush1.msra.mxu0 0.0
    %1280 = vmatprep.subr.mxu0 0.0
    %1281 = vmatpush1.msra.mxu0 0.0
    %1282 = vmatprep.subr.mxu0 0.0
    %1283 = vmatpush1.msra.mxu0 0.0
    %1284 = vmatprep.subr.mxu0 0.0
    %1285 = vmatpush1.msra.mxu0 0.0
    %1286 = vmatprep.subr.mxu0 0.0
    %1287 = vmatpush1.msra.mxu0 0.0
    %1288 = vmatprep.subr.mxu0 0.0
    %1289 = vmatpush1.msra.mxu0 0.0
    %1290 = vmatprep.subr.mxu0 0.0
    %1291 = vmatpush1.msra.mxu0 0.0
    %1292 = vmatprep.subr.mxu0 0.0
    %1293 = vmatpush1.msra.mxu0 0.0
    %1294 = vmatprep.mubr.f32.mxu0 0.0
    %1295 = vmatmul.mubr.f32.gmra.mrb[0].mxu0 %v1154
    %v1296 = vpop.f32.mrb[0].mxu0
    %v1297 = vadd.f32 0.0, %v1296
    %v1298 = vpop.f32.mrb[0].mxu0
    %1299 = vdwg.mxu0
    %v1300 = vadd.f32 %v1156, %v1226
    %v1301 = vxor.u32 %v1300, 2147483648
    %v1302 = vmul.f32 %v1301, 1.442695
    %v1303 = vpow.pop %v1302
    %v1304 = vadd.f32 %v1303, 1.0
    %v1305 = vrcp.pop %v1304
    %v1306 = vmul.f32 1.0, %v1305
    %v1307 = vadd.f32 %v1157, %v1228
    %v1308 = vxor.u32 %v1307, 2147483648
    %v1309 = vmul.f32 %v1308, 1.442695
    %v1310 = vpow.pop %v1309
    %v1311 = vadd.f32 %v1310, 1.0
    %v1312 = vrcp.pop %v1311
    %v1313 = vmul.f32 1.0, %v1312
    %v1314 = vadd.f32 %v1297, %v438
    %v1315 = vmul.f32 %v1306, %v1314
    %v1316 = vadd.f32 %v1158, %v1315
    %v1317 = vtanh.pop %v1316
    %v1318 = vsub.f32 1.0, %v1313
    %v1319 = vmul.f32 %v1318, %v1317
    %v1320 = vmul.f32 %v1313, %v1154
    %v1321 = vadd.f32 %v1319, %v1320
    %s1322 = scalar_lea.vmem [#allocation2], 120
    %v1323 = vld [vmem:[%s1322] sm:$0xff]
    %v1324 = vld [vmem:[%s1322 + $0x8] sm:$0xff]
    %v1325 = vld [vmem:[%s1322 + $0x10] sm:$0xff]
    %1326 = vmatprep.subr.mxu0 %v444
    %1327 = vmatpush1.msra.mxu0 %v443
    %1328 = vmatprep.subr.mxu0 %v447
    %1329 = vmatpush1.msra.mxu0 %v446
    %1330 = vmatprep.subr.mxu0 %v450
    %1331 = vmatpush1.msra.mxu0 %v449
    %1332 = vmatprep.subr.mxu0 %v453
    %1333 = vmatpush1.msra.mxu0 %v452
    %1334 = vmatprep.subr.mxu0 %v456
    %1335 = vmatpush1.msra.mxu0 %v455
    %1336 = vmatprep.subr.mxu0 %v459
    %1337 = vmatpush1.msra.mxu0 %v458
    %1338 = vmatprep.subr.mxu0 %v462
    %1339 = vmatpush1.msra.mxu0 %v461
    %1340 = vmatprep.subr.mxu0 %v465
    %1341 = vmatpush1.msra.mxu0 %v464
    %1342 = vmatprep.subr.mxu0 %v468
    %1343 = vmatpush1.msra.mxu0 %v467
    %1344 = vmatprep.subr.mxu0 %v471
    %1345 = vmatpush1.msra.mxu0 %v470
    %1346 = vmatprep.subr.mxu0 %v474
    %1347 = vmatpush1.msra.mxu0 %v473
    %1348 = vmatprep.subr.mxu0 %v477
    %1349 = vmatpush1.msra.mxu0 %v476
    %1350 = vmatprep.subr.mxu0 %v480
    %1351 = vmatpush1.msra.mxu0 %v479
    %1352 = vmatprep.subr.mxu0 %v483
    %1353 = vmatpush1.msra.mxu0 %v482
    %1354 = vmatprep.subr.mxu0 %v486
    %1355 = vmatpush1.msra.mxu0 %v485
    %1356 = vmatprep.subr.mxu0 %v489
    %1357 = vmatpush1.msra.mxu0 %v488
    %1358 = vmatprep.subr.mxu0 0.0
    %1359 = vmatpush1.msra.mxu0 0.0
    %1360 = vmatprep.subr.mxu0 0.0
    %1361 = vmatpush1.msra.mxu0 0.0
    %1362 = vmatprep.subr.mxu0 0.0
    %1363 = vmatpush1.msra.mxu0 0.0
    %1364 = vmatprep.subr.mxu0 0.0
    %1365 = vmatpush1.msra.mxu0 0.0
    %1366 = vmatprep.subr.mxu0 0.0
    %1367 = vmatpush1.msra.mxu0 0.0
    %1368 = vmatprep.subr.mxu0 0.0
    %1369 = vmatpush1.msra.mxu0 0.0
    %1370 = vmatprep.subr.mxu0 0.0
    %1371 = vmatpush1.msra.mxu0 0.0
    %1372 = vmatprep.subr.mxu0 0.0
    %1373 = vmatpush1.msra.mxu0 0.0
    %1374 = vmatprep.subr.mxu0 0.0
    %1375 = vmatpush1.msra.mxu0 0.0
    %1376 = vmatprep.subr.mxu0 0.0
    %1377 = vmatpush1.msra.mxu0 0.0
    %1378 = vmatprep.subr.mxu0 0.0
    %1379 = vmatpush1.msra.mxu0 0.0
    %1380 = vmatprep.subr.mxu0 0.0
    %1381 = vmatpush1.msra.mxu0 0.0
    %1382 = vmatprep.subr.mxu0 0.0
    %1383 = vmatpush1.msra.mxu0 0.0
    %1384 = vmatprep.subr.mxu0 0.0
    %1385 = vmatpush1.msra.mxu0 0.0
    %1386 = vmatprep.subr.mxu0 0.0
    %1387 = vmatpush1.msra.mxu0 0.0
    %1388 = vmatprep.subr.mxu0 0.0
    %1389 = vmatpush1.msra.mxu0 0.0
    %1390 = vmatprep.mubr.f32.mxu0 0.0
    %1391 = vmatmul.mubr.f32.gmra.mrb[0].mxu0 %v1321
    %v1392 = vpop.f32.mrb[0].mxu0
    %v1393 = vadd.f32 0.0, %v1392
    %v1394 = vpop.f32.mrb[0].mxu0
    %v1395 = vadd.f32 0.0, %v1394
    %1396 = vdwg.mxu0
    %1397 = vmatprep.subr.mxu0 0.0
    %1398 = vmatpush1.msra.mxu0 %v445
    %1399 = vmatprep.subr.mxu0 0.0
    %1400 = vmatpush1.msra.mxu0 %v448
    %1401 = vmatprep.subr.mxu0 0.0
    %1402 = vmatpush1.msra.mxu0 %v451
    %1403 = vmatprep.subr.mxu0 0.0
    %1404 = vmatpush1.msra.mxu0 %v454
    %1405 = vmatprep.subr.mxu0 0.0
    %1406 = vmatpush1.msra.mxu0 %v457
    %1407 = vmatprep.subr.mxu0 0.0
    %1408 = vmatpush1.msra.mxu0 %v460
    %1409 = vmatprep.subr.mxu0 0.0
    %1410 = vmatpush1.msra.mxu0 %v463
    %1411 = vmatprep.subr.mxu0 0.0
    %1412 = vmatpush1.msra.mxu0 %v466
    %1413 = vmatprep.subr.mxu0 0.0
    %1414 = vmatpush1.msra.mxu0 %v469
    %1415 = vmatprep.subr.mxu0 0.0
    %1416 = vmatpush1.msra.mxu0 %v472
    %1417 = vmatprep.subr.mxu0 0.0
    %1418 = vmatpush1.msra.mxu0 %v475
    %1419 = vmatprep.subr.mxu0 0.0
    %1420 = vmatpush1.msra.mxu0 %v478
    %1421 = vmatprep.subr.mxu0 0.0
    %1422 = vmatpush1.msra.mxu0 %v481
    %1423 = vmatprep.subr.mxu0 0.0
    %1424 = vmatpush1.msra.mxu0 %v484
    %1425 = vmatprep.subr.mxu0 0.0
    %1426 = vmatpush1.msra.mxu0 %v487
    %1427 = vmatprep.subr.mxu0 0.0
    %1428 = vmatpush1.msra.mxu0 %v490
    %1429 = vmatprep.subr.mxu0 0.0
    %1430 = vmatpush1.msra.mxu0 0.0
    %1431 = vmatprep.subr.mxu0 0.0
    %1432 = vmatpush1.msra.mxu0 0.0
    %1433 = vmatprep.subr.mxu0 0.0
    %1434 = vmatpush1.msra.mxu0 0.0
    %1435 = vmatprep.subr.mxu0 0.0
    %1436 = vmatpush1.msra.mxu0 0.0
    %1437 = vmatprep.subr.mxu0 0.0
    %1438 = vmatpush1.msra.mxu0 0.0
    %1439 = vmatprep.subr.mxu0 0.0
    %1440 = vmatpush1.msra.mxu0 0.0
    %1441 = vmatprep.subr.mxu0 0.0
    %1442 = vmatpush1.msra.mxu0 0.0
    %1443 = vmatprep.subr.mxu0 0.0
    %1444 = vmatpush1.msra.mxu0 0.0
    %1445 = vmatprep.subr.mxu0 0.0
    %1446 = vmatpush1.msra.mxu0 0.0
    %1447 = vmatprep.subr.mxu0 0.0
    %1448 = vmatpush1.msra.mxu0 0.0
    %1449 = vmatprep.subr.mxu0 0.0
    %1450 = vmatpush1.msra.mxu0 0.0
    %1451 = vmatprep.subr.mxu0 0.0
    %1452 = vmatpush1.msra.mxu0 0.0
    %1453 = vmatprep.subr.mxu0 0.0
    %1454 = vmatpush1.msra.mxu0 0.0
    %1455 = vmatprep.subr.mxu0 0.0
    %1456 = vmatpush1.msra.mxu0 0.0
    %1457 = vmatprep.subr.mxu0 0.0
    %1458 = vmatpush1.msra.mxu0 0.0
    %1459 = vmatprep.subr.mxu0 0.0
    %1460 = vmatpush1.msra.mxu0 0.0
    %1461 = vmatprep.mubr.f32.mxu0 0.0
    %1462 = vmatmul.mubr.f32.gmra.mrb[0].mxu0 %v1321
    %v1463 = vpop.f32.mrb[0].mxu0
    %v1464 = vadd.f32 0.0, %v1463
    %v1465 = vpop.f32.mrb[0].mxu0
    %1466 = vdwg.mxu0
    %v1467 = vadd.f32 %v1323, %v1393
    %v1468 = vxor.u32 %v1467, 2147483648
    %v1469 = vmul.f32 %v1468, 1.442695
    %v1470 = vpow.pop %v1469
    %v1471 = vadd.f32 %v1470, 1.0
    %v1472 = vrcp.pop %v1471
    %v1473 = vmul.f32 1.0, %v1472
    %v1474 = vadd.f32 %v1324, %v1395
    %v1475 = vxor.u32 %v1474, 2147483648
    %v1476 = vmul.f32 %v1475, 1.442695
    %v1477 = vpow.pop %v1476
    %v1478 = vadd.f32 %v1477, 1.0
    %v1479 = vrcp.pop %v1478
    %v1480 = vmul.f32 1.0, %v1479
    %v1481 = vadd.f32 %v1464, %v438
    %v1482 = vmul.f32 %v1473, %v1481
    %v1483 = vadd.f32 %v1325, %v1482
    %v1484 = vtanh.pop %v1483
    %v1485 = vsub.f32 1.0, %v1480
    %v1486 = vmul.f32 %v1485, %v1484
    %v1487 = vmul.f32 %v1480, %v1321
    %v1488 = vadd.f32 %v1486, %v1487
    %s1489 = scalar_lea.vmem [#allocation2], 144
    %v1490 = vld [vmem:[%s1489] sm:$0xff]
    %v1491 = vld [vmem:[%s1489 + $0x8] sm:$0xff]
    %v1492 = vld [vmem:[%s1489 + $0x10] sm:$0xff]
    %1493 = vmatprep.subr.mxu0 %v444
    %1494 = vmatpush1.msra.mxu0 %v443
    %1495 = vmatprep.subr.mxu0 %v447
    %1496 = vmatpush1.msra.mxu0 %v446
    %1497 = vmatprep.subr.mxu0 %v450
    %1498 = vmatpush1.msra.mxu0 %v449
    %1499 = vmatprep.subr.mxu0 %v453
    %1500 = vmatpush1.msra.mxu0 %v452
    %1501 = vmatprep.subr.mxu0 %v456
    %1502 = vmatpush1.msra.mxu0 %v455
    %1503 = vmatprep.subr.mxu0 %v459
    %1504 = vmatpush1.msra.mxu0 %v458
    %1505 = vmatprep.subr.mxu0 %v462
    %1506 = vmatpush1.msra.mxu0 %v461
    %1507 = vmatprep.subr.mxu0 %v465
    %1508 = vmatpush1.msra.mxu0 %v464
    %1509 = vmatprep.subr.mxu0 %v468
    %1510 = vmatpush1.msra.mxu0 %v467
    %1511 = vmatprep.subr.mxu0 %v471
    %1512 = vmatpush1.msra.mxu0 %v470
    %1513 = vmatprep.subr.mxu0 %v474
    %1514 = vmatpush1.msra.mxu0 %v473
    %1515 = vmatprep.subr.mxu0 %v477
    %1516 = vmatpush1.msra.mxu0 %v476
    %1517 = vmatprep.subr.mxu0 %v480
    %1518 = vmatpush1.msra.mxu0 %v479
    %1519 = vmatprep.subr.mxu0 %v483
    %1520 = vmatpush1.msra.mxu0 %v482
    %1521 = vmatprep.subr.mxu0 %v486
    %1522 = vmatpush1.msra.mxu0 %v485
    %1523 = vmatprep.subr.mxu0 %v489
    %1524 = vmatpush1.msra.mxu0 %v488
    %1525 = vmatprep.subr.mxu0 0.0
    %1526 = vmatpush1.msra.mxu0 0.0
    %1527 = vmatprep.subr.mxu0 0.0
    %1528 = vmatpush1.msra.mxu0 0.0
    %1529 = vmatprep.subr.mxu0 0.0
    %1530 = vmatpush1.msra.mxu0 0.0
    %1531 = vmatprep.subr.mxu0 0.0
    %1532 = vmatpush1.msra.mxu0 0.0
    %1533 = vmatprep.subr.mxu0 0.0
    %1534 = vmatpush1.msra.mxu0 0.0
    %1535 = vmatprep.subr.mxu0 0.0
    %1536 = vmatpush1.msra.mxu0 0.0
    %1537 = vmatprep.subr.mxu0 0.0
    %1538 = vmatpush1.msra.mxu0 0.0
    %1539 = vmatprep.subr.mxu0 0.0
    %1540 = vmatpush1.msra.mxu0 0.0
    %1541 = vmatprep.subr.mxu0 0.0
    %1542 = vmatpush1.msra.mxu0 0.0
    %1543 = vmatprep.subr.mxu0 0.0
    %1544 = vmatpush1.msra.mxu0 0.0
    %1545 = vmatprep.subr.mxu0 0.0
    %1546 = vmatpush1.msra.mxu0 0.0
    %1547 = vmatprep.subr.mxu0 0.0
    %1548 = vmatpush1.msra.mxu0 0.0
    %1549 = vmatprep.subr.mxu0 0.0
    %1550 = vmatpush1.msra.mxu0 0.0
    %1551 = vmatprep.subr.mxu0 0.0
    %1552 = vmatpush1.msra.mxu0 0.0
    %1553 = vmatprep.subr.mxu0 0.0
    %1554 = vmatpush1.msra.mxu0 0.0
    %1555 = vmatprep.subr.mxu0 0.0
    %1556 = vmatpush1.msra.mxu0 0.0
    %1557 = vmatprep.mubr.f32.mxu0 0.0
    %1558 = vmatmul.mubr.f32.gmra.mrb[0].mxu0 %v1488
    %v1559 = vpop.f32.mrb[0].mxu0
    %v1560 = vadd.f32 0.0, %v1559
    %v1561 = vpop.f32.mrb[0].mxu0
    %v1562 = vadd.f32 0.0, %v1561
    %1563 = vdwg.mxu0
    %1564 = vmatprep.subr.mxu0 0.0
    %1565 = vmatpush1.msra.mxu0 %v445
    %1566 = vmatprep.subr.mxu0 0.0
    %1567 = vmatpush1.msra.mxu0 %v448
    %1568 = vmatprep.subr.mxu0 0.0
    %1569 = vmatpush1.msra.mxu0 %v451
    %1570 = vmatprep.subr.mxu0 0.0
    %1571 = vmatpush1.msra.mxu0 %v454
    %1572 = vmatprep.subr.mxu0 0.0
    %1573 = vmatpush1.msra.mxu0 %v457
    %1574 = vmatprep.subr.mxu0 0.0
    %1575 = vmatpush1.msra.mxu0 %v460
    %1576 = vmatprep.subr.mxu0 0.0
    %1577 = vmatpush1.msra.mxu0 %v463
    %1578 = vmatprep.subr.mxu0 0.0
    %1579 = vmatpush1.msra.mxu0 %v466
    %1580 = vmatprep.subr.mxu0 0.0
    %1581 = vmatpush1.msra.mxu0 %v469
    %1582 = vmatprep.subr.mxu0 0.0
    %1583 = vmatpush1.msra.mxu0 %v472
    %1584 = vmatprep.subr.mxu0 0.0
    %1585 = vmatpush1.msra.mxu0 %v475
    %1586 = vmatprep.subr.mxu0 0.0
    %1587 = vmatpush1.msra.mxu0 %v478
    %1588 = vmatprep.subr.mxu0 0.0
    %1589 = vmatpush1.msra.mxu0 %v481
    %1590 = vmatprep.subr.mxu0 0.0
    %1591 = vmatpush1.msra.mxu0 %v484
    %1592 = vmatprep.subr.mxu0 0.0
    %1593 = vmatpush1.msra.mxu0 %v487
    %1594 = vmatprep.subr.mxu0 0.0
    %1595 = vmatpush1.msra.mxu0 %v490
    %1596 = vmatprep.subr.mxu0 0.0
    %1597 = vmatpush1.msra.mxu0 0.0
    %1598 = vmatprep.subr.mxu0 0.0
    %1599 = vmatpush1.msra.mxu0 0.0
    %1600 = vmatprep.subr.mxu0 0.0
    %1601 = vmatpush1.msra.mxu0 0.0
    %1602 = vmatprep.subr.mxu0 0.0
    %1603 = vmatpush1.msra.mxu0 0.0
    %1604 = vmatprep.subr.mxu0 0.0
    %1605 = vmatpush1.msra.mxu0 0.0
    %1606 = vmatprep.subr.mxu0 0.0
    %1607 = vmatpush1.msra.mxu0 0.0
    %1608 = vmatprep.subr.mxu0 0.0
    %1609 = vmatpush1.msra.mxu0 0.0
    %1610 = vmatprep.subr.mxu0 0.0
    %1611 = vmatpush1.msra.mxu0 0.0
    %1612 = vmatprep.subr.mxu0 0.0
    %1613 = vmatpush1.msra.mxu0 0.0
    %1614 = vmatprep.subr.mxu0 0.0
    %1615 = vmatpush1.msra.mxu0 0.0
    %1616 = vmatprep.subr.mxu0 0.0
    %1617 = vmatpush1.msra.mxu0 0.0
    %1618 = vmatprep.subr.mxu0 0.0
    %1619 = vmatpush1.msra.mxu0 0.0
    %1620 = vmatprep.subr.mxu0 0.0
    %1621 = vmatpush1.msra.mxu0 0.0
    %1622 = vmatprep.subr.mxu0 0.0
    %1623 = vmatpush1.msra.mxu0 0.0
    %1624 = vmatprep.subr.mxu0 0.0
    %1625 = vmatpush1.msra.mxu0 0.0
    %1626 = vmatprep.subr.mxu0 0.0
    %1627 = vmatpush1.msra.mxu0 0.0
    %1628 = vmatprep.mubr.f32.mxu0 0.0
    %1629 = vmatmul.mubr.f32.gmra.mrb[0].mxu0 %v1488
    %v1630 = vpop.f32.mrb[0].mxu0
    %v1631 = vadd.f32 0.0, %v1630
    %v1632 = vpop.f32.mrb[0].mxu0
    %1633 = vdwg.mxu0
    %v1634 = vadd.f32 %v1490, %v1560
    %v1635 = vxor.u32 %v1634, 2147483648
    %v1636 = vmul.f32 %v1635, 1.442695
    %v1637 = vpow.pop %v1636
    %v1638 = vadd.f32 %v1637, 1.0
    %v1639 = vrcp.pop %v1638
    %v1640 = vmul.f32 1.0, %v1639
    %v1641 = vadd.f32 %v1491, %v1562
    %v1642 = vxor.u32 %v1641, 2147483648
    %v1643 = vmul.f32 %v1642, 1.442695
    %v1644 = vpow.pop %v1643
    %v1645 = vadd.f32 %v1644, 1.0
    %v1646 = vrcp.pop %v1645
    %v1647 = vmul.f32 1.0, %v1646
    %v1648 = vadd.f32 %v1631, %v438
    %v1649 = vmul.f32 %v1640, %v1648
    %v1650 = vadd.f32 %v1492, %v1649
    %v1651 = vtanh.pop %v1650
    %v1652 = vsub.f32 1.0, %v1647
    %v1653 = vmul.f32 %v1652, %v1651
    %v1654 = vmul.f32 %v1647, %v1488
    %v1655 = vadd.f32 %v1653, %v1654
    %s1656 = scalar_lea.vmem [#allocation2], 168
    %v1657 = vld [vmem:[%s1656] sm:$0xff]
    %v1658 = vld [vmem:[%s1656 + $0x8] sm:$0xff]
    %v1659 = vld [vmem:[%s1656 + $0x10] sm:$0xff]
    %1660 = vmatprep.subr.mxu0 %v444
    %1661 = vmatpush1.msra.mxu0 %v443
    %1662 = vmatprep.subr.mxu0 %v447
    %1663 = vmatpush1.msra.mxu0 %v446
    %1664 = vmatprep.subr.mxu0 %v450
    %1665 = vmatpush1.msra.mxu0 %v449
    %1666 = vmatprep.subr.mxu0 %v453
    %1667 = vmatpush1.msra.mxu0 %v452
    %1668 = vmatprep.subr.mxu0 %v456
    %1669 = vmatpush1.msra.mxu0 %v455
    %1670 = vmatprep.subr.mxu0 %v459
    %1671 = vmatpush1.msra.mxu0 %v458
    %1672 = vmatprep.subr.mxu0 %v462
    %1673 = vmatpush1.msra.mxu0 %v461
    %1674 = vmatprep.subr.mxu0 %v465
    %1675 = vmatpush1.msra.mxu0 %v464
    %1676 = vmatprep.subr.mxu0 %v468
    %1677 = vmatpush1.msra.mxu0 %v467
    %1678 = vmatprep.subr.mxu0 %v471
    %1679 = vmatpush1.msra.mxu0 %v470
    %1680 = vmatprep.subr.mxu0 %v474
    %1681 = vmatpush1.msra.mxu0 %v473
    %1682 = vmatprep.subr.mxu0 %v477
    %1683 = vmatpush1.msra.mxu0 %v476
    %1684 = vmatprep.subr.mxu0 %v480
    %1685 = vmatpush1.msra.mxu0 %v479
    %1686 = vmatprep.subr.mxu0 %v483
    %1687 = vmatpush1.msra.mxu0 %v482
    %1688 = vmatprep.subr.mxu0 %v486
    %1689 = vmatpush1.msra.mxu0 %v485
    %1690 = vmatprep.subr.mxu0 %v489
    %1691 = vmatpush1.msra.mxu0 %v488
    %1692 = vmatprep.subr.mxu0 0.0
    %1693 = vmatpush1.msra.mxu0 0.0
    %1694 = vmatprep.subr.mxu0 0.0
    %1695 = vmatpush1.msra.mxu0 0.0
    %1696 = vmatprep.subr.mxu0 0.0
    %1697 = vmatpush1.msra.mxu0 0.0
    %1698 = vmatprep.subr.mxu0 0.0
    %1699 = vmatpush1.msra.mxu0 0.0
    %1700 = vmatprep.subr.mxu0 0.0
    %1701 = vmatpush1.msra.mxu0 0.0
    %1702 = vmatprep.subr.mxu0 0.0
    %1703 = vmatpush1.msra.mxu0 0.0
    %1704 = vmatprep.subr.mxu0 0.0
    %1705 = vmatpush1.msra.mxu0 0.0
    %1706 = vmatprep.subr.mxu0 0.0
    %1707 = vmatpush1.msra.mxu0 0.0
    %1708 = vmatprep.subr.mxu0 0.0
    %1709 = vmatpush1.msra.mxu0 0.0
    %1710 = vmatprep.subr.mxu0 0.0
    %1711 = vmatpush1.msra.mxu0 0.0
    %1712 = vmatprep.subr.mxu0 0.0
    %1713 = vmatpush1.msra.mxu0 0.0
    %1714 = vmatprep.subr.mxu0 0.0
    %1715 = vmatpush1.msra.mxu0 0.0
    %1716 = vmatprep.subr.mxu0 0.0
    %1717 = vmatpush1.msra.mxu0 0.0
    %1718 = vmatprep.subr.mxu0 0.0
    %1719 = vmatpush1.msra.mxu0 0.0
    %1720 = vmatprep.subr.mxu0 0.0
    %1721 = vmatpush1.msra.mxu0 0.0
    %1722 = vmatprep.subr.mxu0 0.0
    %1723 = vmatpush1.msra.mxu0 0.0
    %1724 = vmatprep.mubr.f32.mxu0 0.0
    %1725 = vmatmul.mubr.f32.gmra.mrb[0].mxu0 %v1655
    %v1726 = vpop.f32.mrb[0].mxu0
    %v1727 = vadd.f32 0.0, %v1726
    %v1728 = vpop.f32.mrb[0].mxu0
    %v1729 = vadd.f32 0.0, %v1728
    %1730 = vdwg.mxu0
    %1731 = vmatprep.subr.mxu0 0.0
    %1732 = vmatpush1.msra.mxu0 %v445
    %1733 = vmatprep.subr.mxu0 0.0
    %1734 = vmatpush1.msra.mxu0 %v448
    %1735 = vmatprep.subr.mxu0 0.0
    %1736 = vmatpush1.msra.mxu0 %v451
    %1737 = vmatprep.subr.mxu0 0.0
    %1738 = vmatpush1.msra.mxu0 %v454
    %1739 = vmatprep.subr.mxu0 0.0
    %1740 = vmatpush1.msra.mxu0 %v457
    %1741 = vmatprep.subr.mxu0 0.0
    %1742 = vmatpush1.msra.mxu0 %v460
    %1743 = vmatprep.subr.mxu0 0.0
    %1744 = vmatpush1.msra.mxu0 %v463
    %1745 = vmatprep.subr.mxu0 0.0
    %1746 = vmatpush1.msra.mxu0 %v466
    %1747 = vmatprep.subr.mxu0 0.0
    %1748 = vmatpush1.msra.mxu0 %v469
    %1749 = vmatprep.subr.mxu0 0.0
    %1750 = vmatpush1.msra.mxu0 %v472
    %1751 = vmatprep.subr.mxu0 0.0
    %1752 = vmatpush1.msra.mxu0 %v475
    %1753 = vmatprep.subr.mxu0 0.0
    %1754 = vmatpush1.msra.mxu0 %v478
    %1755 = vmatprep.subr.mxu0 0.0
    %1756 = vmatpush1.msra.mxu0 %v481
    %1757 = vmatprep.subr.mxu0 0.0
    %1758 = vmatpush1.msra.mxu0 %v484
    %1759 = vmatprep.subr.mxu0 0.0
    %1760 = vmatpush1.msra.mxu0 %v487
    %1761 = vmatprep.subr.mxu0 0.0
    %1762 = vmatpush1.msra.mxu0 %v490
    %1763 = vmatprep.subr.mxu0 0.0
    %1764 = vmatpush1.msra.mxu0 0.0
    %1765 = vmatprep.subr.mxu0 0.0
    %1766 = vmatpush1.msra.mxu0 0.0
    %1767 = vmatprep.subr.mxu0 0.0
    %1768 = vmatpush1.msra.mxu0 0.0
    %1769 = vmatprep.subr.mxu0 0.0
    %1770 = vmatpush1.msra.mxu0 0.0
    %1771 = vmatprep.subr.mxu0 0.0
    %1772 = vmatpush1.msra.mxu0 0.0
    %1773 = vmatprep.subr.mxu0 0.0
    %1774 = vmatpush1.msra.mxu0 0.0
    %1775 = vmatprep.subr.mxu0 0.0
    %1776 = vmatpush1.msra.mxu0 0.0
    %1777 = vmatprep.subr.mxu0 0.0
    %1778 = vmatpush1.msra.mxu0 0.0
    %1779 = vmatprep.subr.mxu0 0.0
    %1780 = vmatpush1.msra.mxu0 0.0
    %1781 = vmatprep.subr.mxu0 0.0
    %1782 = vmatpush1.msra.mxu0 0.0
    %1783 = vmatprep.subr.mxu0 0.0
    %1784 = vmatpush1.msra.mxu0 0.0
    %1785 = vmatprep.subr.mxu0 0.0
    %1786 = vmatpush1.msra.mxu0 0.0
    %1787 = vmatprep.subr.mxu0 0.0
    %1788 = vmatpush1.msra.mxu0 0.0
    %1789 = vmatprep.subr.mxu0 0.0
    %1790 = vmatpush1.msra.mxu0 0.0
    %1791 = vmatprep.subr.mxu0 0.0
    %1792 = vmatpush1.msra.mxu0 0.0
    %1793 = vmatprep.subr.mxu0 0.0
    %1794 = vmatpush1.msra.mxu0 0.0
    %1795 = vmatprep.mubr.f32.mxu0 0.0
    %1796 = vmatmul.mubr.f32.gmra.mrb[0].mxu0 %v1655
    %v1797 = vpop.f32.mrb[0].mxu0
    %v1798 = vadd.f32 0.0, %v1797
    %v1799 = vpop.f32.mrb[0].mxu0
    %1800 = vdwg.mxu0
    %v1801 = vadd.f32 %v1657, %v1727
    %v1802 = vxor.u32 %v1801, 2147483648
    %v1803 = vmul.f32 %v1802, 1.442695
    %v1804 = vpow.pop %v1803
    %v1805 = vadd.f32 %v1804, 1.0
    %v1806 = vrcp.pop %v1805
    %v1807 = vmul.f32 1.0, %v1806
    %v1808 = vadd.f32 %v1658, %v1729
    %v1809 = vxor.u32 %v1808, 2147483648
    %v1810 = vmul.f32 %v1809, 1.442695
    %v1811 = vpow.pop %v1810
    %v1812 = vadd.f32 %v1811, 1.0
    %v1813 = vrcp.pop %v1812
    %v1814 = vmul.f32 1.0, %v1813
    %v1815 = vadd.f32 %v1798, %v438
    %v1816 = vmul.f32 %v1807, %v1815
    %v1817 = vadd.f32 %v1659, %v1816
    %v1818 = vtanh.pop %v1817
    %v1819 = vsub.f32 1.0, %v1814
    %v1820 = vmul.f32 %v1819, %v1818
    %v1821 = vmul.f32 %v1814, %v1655
    %v1822 = vadd.f32 %v1820, %v1821
    %s1823 = scalar_lea.vmem [#allocation4], 32
    %v1824 = vld [vmem:[%s1823] sm:$0xff]
    %v1825 = vld [vmem:[%s1823 + $0x8] sm:$0xff]
    %v1826 = vld [vmem:[%s1823 + $0x10] sm:$0xff]
    %v1827 = vld [vmem:[%s1823 + $0x18] sm:$0xff]
    %v1828 = vld [vmem:[#allocation8] sm:$0xff]
    %v1829 = vld [vmem:[#allocation8 + $0x8] sm:$0xff]
    %v1830 = vld [vmem:[#allocation8 + $0x10] sm:$0xff]
    %v1831 = vld [vmem:[#allocation8 + $0x18] sm:$0xff]
    %v1832 = vld [vmem:[#allocation8 + $0x20] sm:$0xff]
    %v1833 = vld [vmem:[#allocation8 + $0x28] sm:$0xff]
    %v1834 = vld [vmem:[#allocation8 + $0x30] sm:$0xff]
    %v1835 = vld [vmem:[#allocation8 + $0x38] sm:$0xff]
    %v1836 = vld [vmem:[#allocation8 + $0x40] sm:$0xff]
    %v1837 = vld [vmem:[#allocation8 + $0x48] sm:$0xff]
    %v1838 = vld [vmem:[#allocation8 + $0x50] sm:$0xff]
    %v1839 = vld [vmem:[#allocation8 + $0x58] sm:$0xff]
    %v1840 = vld [vmem:[#allocation8 + $0x60] sm:$0xff]
    %v1841 = vld [vmem:[#allocation8 + $0x68] sm:$0xff]
    %v1842 = vld [vmem:[#allocation8 + $0x70] sm:$0xff]
    %v1843 = vld [vmem:[#allocation8 + $0x78] sm:$0xff]
    %1844 = vmatprep.subr.mxu0 0.0
    %1845 = vmatpush1.msra.mxu0 %v1828
    %1846 = vmatprep.subr.mxu0 0.0
    %1847 = vmatpush1.msra.mxu0 %v1829
    %1848 = vmatprep.subr.mxu0 0.0
    %1849 = vmatpush1.msra.mxu0 %v1830
    %1850 = vmatprep.subr.mxu0 0.0
    %1851 = vmatpush1.msra.mxu0 %v1831
    %1852 = vmatprep.subr.mxu0 0.0
    %1853 = vmatpush1.msra.mxu0 %v1832
    %1854 = vmatprep.subr.mxu0 0.0
    %1855 = vmatpush1.msra.mxu0 %v1833
    %1856 = vmatprep.subr.mxu0 0.0
    %1857 = vmatpush1.msra.mxu0 %v1834
    %1858 = vmatprep.subr.mxu0 0.0
    %1859 = vmatpush1.msra.mxu0 %v1835
    %1860 = vmatprep.subr.mxu0 0.0
    %1861 = vmatpush1.msra.mxu0 %v1836
    %1862 = vmatprep.subr.mxu0 0.0
    %1863 = vmatpush1.msra.mxu0 %v1837
    %1864 = vmatprep.subr.mxu0 0.0
    %1865 = vmatpush1.msra.mxu0 %v1838
    %1866 = vmatprep.subr.mxu0 0.0
    %1867 = vmatpush1.msra.mxu0 %v1839
    %1868 = vmatprep.subr.mxu0 0.0
    %1869 = vmatpush1.msra.mxu0 %v1840
    %1870 = vmatprep.subr.mxu0 0.0
    %1871 = vmatpush1.msra.mxu0 %v1841
    %1872 = vmatprep.subr.mxu0 0.0
    %1873 = vmatpush1.msra.mxu0 %v1842
    %1874 = vmatprep.subr.mxu0 0.0
    %1875 = vmatpush1.msra.mxu0 %v1843
    %1876 = vmatprep.subr.mxu0 0.0
    %1877 = vmatpush1.msra.mxu0 0.0
    %1878 = vmatprep.subr.mxu0 0.0
    %1879 = vmatpush1.msra.mxu0 0.0
    %1880 = vmatprep.subr.mxu0 0.0
    %1881 = vmatpush1.msra.mxu0 0.0
    %1882 = vmatprep.subr.mxu0 0.0
    %1883 = vmatpush1.msra.mxu0 0.0
    %1884 = vmatprep.subr.mxu0 0.0
    %1885 = vmatpush1.msra.mxu0 0.0
    %1886 = vmatprep.subr.mxu0 0.0
    %1887 = vmatpush1.msra.mxu0 0.0
    %1888 = vmatprep.subr.mxu0 0.0
    %1889 = vmatpush1.msra.mxu0 0.0
    %1890 = vmatprep.subr.mxu0 0.0
    %1891 = vmatpush1.msra.mxu0 0.0
    %1892 = vmatprep.subr.mxu0 0.0
    %1893 = vmatpush1.msra.mxu0 0.0
    %1894 = vmatprep.subr.mxu0 0.0
    %1895 = vmatpush1.msra.mxu0 0.0
    %1896 = vmatprep.subr.mxu0 0.0
    %1897 = vmatpush1.msra.mxu0 0.0
    %1898 = vmatprep.subr.mxu0 0.0
    %1899 = vmatpush1.msra.mxu0 0.0
    %1900 = vmatprep.subr.mxu0 0.0
    %1901 = vmatpush1.msra.mxu0 0.0
    %1902 = vmatprep.subr.mxu0 0.0
    %1903 = vmatpush1.msra.mxu0 0.0
    %1904 = vmatprep.subr.mxu0 0.0
    %1905 = vmatpush1.msra.mxu0 0.0
    %1906 = vmatprep.subr.mxu0 0.0
    %1907 = vmatpush1.msra.mxu0 0.0
    %1908 = vmatprep.mubr.f32.mxu0 0.0
    %1909 = vmatmul.mubr.f32.gmra.mrb[0].mxu0 %v1824
    %v1910 = vpop.f32.mrb[0].mxu0
    %v1911 = vadd.f32 0.0, %v1910
    %v1912 = vpop.f32.mrb[0].mxu0
    %1913 = vmatprep.mubr.f32.mxu0 0.0
    %1914 = vmatmul.mubr.f32.gmra.mrb[0].mxu0 %v1825
    %v1915 = vpop.f32.mrb[0].mxu0
    %v1916 = vadd.f32 0.0, %v1915
    %v1917 = vpop.f32.mrb[0].mxu0
    %1918 = vmatprep.mubr.f32.mxu0 0.0
    %1919 = vmatmul.mubr.f32.gmra.mrb[0].mxu0 %v1826
    %v1920 = vpop.f32.mrb[0].mxu0
    %v1921 = vadd.f32 0.0, %v1920
    %v1922 = vpop.f32.mrb[0].mxu0
    %1923 = vmatprep.mubr.f32.mxu0 0.0
    %1924 = vmatmul.mubr.f32.gmra.mrb[0].mxu0 %v1827
    %v1925 = vpop.f32.mrb[0].mxu0
    %v1926 = vadd.f32 0.0, %v1925
    %v1927 = vpop.f32.mrb[0].mxu0
    %1928 = vdwg.mxu0
    %s1929 = sld [smem:[#allocation14]]
    %v1930 = vstv %s1929
    %v1931 = vmul.f32 %v1930, %v1911
    %v1932 = vadd.f32 %v1931, 0.0
    %s1933 = sld [smem:[#allocation14 + $0x1]]
    %v1934 = vstv %s1933
    %v1935 = vmul.f32 %v1934, %v1916
    %v1936 = vadd.f32 %v1932, %v1935
    %s1937 = sld [smem:[#allocation14 + $0x2]]
    %v1938 = vstv %s1937
    %v1939 = vmul.f32 %v1938, %v1921
    %v1940 = vadd.f32 %v1936, %v1939
    %s1941 = sld [smem:[#allocation14 + $0x3]]
    %v1942 = vstv %s1941
    %v1943 = vmul.f32 %v1942, %v1926
    %v1944 = vadd.f32 %v1940, %v1943
    %v1945 = vld [vmem:[#allocation13] sm:$0xff]
    %v1946 = vld [vmem:[#allocation13 + $0x8] sm:$0xff]
    %v1947 = vld [vmem:[#allocation13 + $0x10] sm:$0xff]
    %v1948 = vld [vmem:[#allocation13 + $0x18] sm:$0xff]
    %v1949 = vld [vmem:[#allocation13 + $0x20] sm:$0xff]
    %v1950 = vld [vmem:[#allocation13 + $0x28] sm:$0xff]
    %v1951 = vld [vmem:[#allocation13 + $0x30] sm:$0xff]
    %v1952 = vld [vmem:[#allocation13 + $0x38] sm:$0xff]
    %v1953 = vld [vmem:[#allocation13 + $0x40] sm:$0xff]
    %v1954 = vld [vmem:[#allocation13 + $0x48] sm:$0xff]
    %v1955 = vld [vmem:[#allocation13 + $0x50] sm:$0xff]
    %v1956 = vld [vmem:[#allocation13 + $0x58] sm:$0xff]
    %v1957 = vld [vmem:[#allocation13 + $0x60] sm:$0xff]
    %v1958 = vld [vmem:[#allocation13 + $0x68] sm:$0xff]
    %v1959 = vld [vmem:[#allocation13 + $0x70] sm:$0xff]
    %v1960 = vld [vmem:[#allocation13 + $0x78] sm:$0xff]
    %v1961 = vld [vmem:[%s7] sm:$0x1]
    %v1963 = vlaneseq
    %v1964 = vshrl.u32 %v1963, 7
    %v1965 = vsub.s32 0, %v1964
    %v1966 = vrot.slane %v1961, %v1965
    %1968 = vmatprep.subr.mxu0 0.0
    %1969 = vmatpush1.msra.mxu0 %v1945
    %1970 = vmatprep.subr.mxu0 0.0
    %1971 = vmatpush1.msra.mxu0 %v1946
    %1972 = vmatprep.subr.mxu0 0.0
    %1973 = vmatpush1.msra.mxu0 %v1947
    %1974 = vmatprep.subr.mxu0 0.0
    %1975 = vmatpush1.msra.mxu0 %v1948
    %1976 = vmatprep.subr.mxu0 0.0
    %1977 = vmatpush1.msra.mxu0 %v1949
    %1978 = vmatprep.subr.mxu0 0.0
    %1979 = vmatpush1.msra.mxu0 %v1950
    %1980 = vmatprep.subr.mxu0 0.0
    %1981 = vmatpush1.msra.mxu0 %v1951
    %1982 = vmatprep.subr.mxu0 0.0
    %1983 = vmatpush1.msra.mxu0 %v1952
    %1984 = vmatprep.subr.mxu0 0.0
    %1985 = vmatpush1.msra.mxu0 %v1953
    %1986 = vmatprep.subr.mxu0 0.0
    %1987 = vmatpush1.msra.mxu0 %v1954
    %1988 = vmatprep.subr.mxu0 0.0
    %1989 = vmatpush1.msra.mxu0 %v1955
    %1990 = vmatprep.subr.mxu0 0.0
    %1991 = vmatpush1.msra.mxu0 %v1956
    %1992 = vmatprep.subr.mxu0 0.0
    %1993 = vmatpush1.msra.mxu0 %v1957
    %1994 = vmatprep.subr.mxu0 0.0
    %1995 = vmatpush1.msra.mxu0 %v1958
    %1996 = vmatprep.subr.mxu0 0.0
    %1997 = vmatpush1.msra.mxu0 %v1959
    %1998 = vmatprep.subr.mxu0 0.0
    %1999 = vmatpush1.msra.mxu0 %v1960
    %2000 = vmatprep.subr.mxu0 0.0
    %2001 = vmatpush1.msra.mxu0 0.0
    %2002 = vmatprep.subr.mxu0 0.0
    %2003 = vmatpush1.msra.mxu0 0.0
    %2004 = vmatprep.subr.mxu0 0.0
    %2005 = vmatpush1.msra.mxu0 0.0
    %2006 = vmatprep.subr.mxu0 0.0
    %2007 = vmatpush1.msra.mxu0 0.0
    %2008 = vmatprep.subr.mxu0 0.0
    %2009 = vmatpush1.msra.mxu0 0.0
    %2010 = vmatprep.subr.mxu0 0.0
    %2011 = vmatpush1.msra.mxu0 0.0
    %2012 = vmatprep.subr.mxu0 0.0
    %2013 = vmatpush1.msra.mxu0 0.0
    %2014 = vmatprep.subr.mxu0 0.0
    %2015 = vmatpush1.msra.mxu0 0.0
    %2016 = vmatprep.subr.mxu0 0.0
    %2017 = vmatpush1.msra.mxu0 0.0
    %2018 = vmatprep.subr.mxu0 0.0
    %2019 = vmatpush1.msra.mxu0 0.0
    %2020 = vmatprep.subr.mxu0 0.0
    %2021 = vmatpush1.msra.mxu0 0.0
    %2022 = vmatprep.subr.mxu0 0.0
    %2023 = vmatpush1.msra.mxu0 0.0
    %2024 = vmatprep.subr.mxu0 0.0
    %2025 = vmatpush1.msra.mxu0 0.0
    %2026 = vmatprep.subr.mxu0 0.0
    %2027 = vmatpush1.msra.mxu0 0.0
    %2028 = vmatprep.subr.mxu0 0.0
    %2029 = vmatpush1.msra.mxu0 0.0
    %2030 = vmatprep.subr.mxu0 0.0
    %2031 = vmatpush1.msra.mxu0 0.0
    %2032 = vmatprep.mubr.f32.mxu0 0.0
    %2033 = vmatmul.mubr.f32.gmra.mrb[0].mxu0 %v1822
    %v2034 = vpop.f32.mrb[0].mxu0
    %v2035 = vadd.f32 %v1966, %v2034
    %v2036 = vpop.f32.mrb[0].mxu0
    %2037 = vdwg.mxu0
    %v2038 = vadd.f32 %v2035, %v1944
    %s2039 = sld [smem:[#allocation3]]
    %v2040 = vstv %s2039
    %v2041 = vadd.f32 %v2038, %v2040
    %2042 = vst [vmem:[#allocation15] sm:$0xff] %v2041
    // Predicated region
    $region66: #{tpu_custom_call.1} parent=1 // pred_check
      _
    $region67: #{tpu_custom_call.1} parent=1 // pred_check_branch
      %2044 = sbr.rel (0) target = $region69
    $region68: #{tpu_custom_call.1} parent=1 // pred_region
      %s2046 = ssub.s32 128, 128
      %2047 = vsyncadd [#allocation6], %s2046
      %s2049 = sshll.u32 [#allocation15], 4
      %s2050 = int_to_ptr.vmem [resolvable:$true] %s2049
      %2052 = dma.vmem_to_hbm [thread:$0]  %s2050, 128, %s10, [#allocation6]
    $region69: #{tpu_custom_call.1} parent=1 // pred_fallthru
      _
    // Predicated region
    $region70: #{tpu_custom_call.1} parent=1 // pred_check
      _
    $region71: #{tpu_custom_call.1} parent=1 // pred_check_branch
      %2054 = sbr.rel (0) target = $region73
    $region72: #{tpu_custom_call.1} parent=1 // pred_region
      %2055 = dma.done [#allocation6], 128
    $region73: #{tpu_custom_call.1} parent=1 // pred_fallthru
      _
    %2056 = vsyncpa [#allocation5], 1
    %2057 = vsyncpa [#allocation9], 1
    %2058 = vsyncpa [#allocation12], 1
    %2059 = vsyncpa [#allocation6], 1
    %2060 = vsyncpa [#allocation7], 1

</llo_original>
